<compile_context>
chip_gen: v5e
topology: v5e:2x2
jax: 0.10.0
libtpu: 0.0.40
codegen_flags: <defaults>
</compile_context>

<pallas_src>
import jax
import jax.numpy as jnp
from jax.experimental import pallas as pl
from jax.experimental.pallas import tpu as pltpu

# config.params equivalents (synthetic, small)
D_ENCODER = 32          # config.params['d_encoder']
D_DECODER = 32          # config.params['d_decoder']
NUM_DECODER_LAYERS = 2  # config.params['num_decoder_layers']
NUM_CLASSES = 16

SEQ_LEN = 8
BATCH = 2


# ---------------------------------------------------------------------------
# Fused kernel: all LSTM layers + Linear + LogSoftmax/Softmax in one pallas_call.
# ---------------------------------------------------------------------------
def _make_decoder_kernel(num_layers, T, B, D, H, C_pad):
    G = 4 * H  # fused gate width (= 128 here: one full vreg lane width)

    def kernel(x_ref, w_ref, b_ref, wout_ref, bout_ref, logsm_ref, sm_ref, h_all):
        # Hoist fused, lane-dense weights out of the unrolled loop.
        # Each (32, 128) f32 matrix is ~4 vregs -> everything stays register/VMEM resident.
        w_ih = [w_ref[2 * l] for l in range(num_layers)]       # (D_in, 4H); [0] used pre-loop
        w_hh = [w_ref[2 * l + 1] for l in range(num_layers)]   # (H, 4H)
        bias = [jnp.broadcast_to(b_ref[l], (B, G)) for l in range(num_layers)]

        # Layer-0 input projection for every timestep (independent of the recurrence):
        # one (T*B, D) @ (D, 4H) matmul instead of T small matmuls inside the loop.
        x_proj = (jnp.dot(x_ref[...], w_ih[0], preferred_element_type=jnp.float32)
                  + jnp.broadcast_to(b_ref[0], (T * B, G)))

        def cell(pre, c):
            # One sigmoid + one tanh over all 4H lanes, gates via static lane slices
            # in PyTorch gate order [i, f, g, o].
            sig = jax.nn.sigmoid(pre)
            th = jnp.tanh(pre)
            i_g = sig[:, 0:H]
            f_g = sig[:, H:2 * H]
            g_g = th[:, 2 * H:3 * H]
            o_g = sig[:, 3 * H:4 * H]
            c_new = f_g * c + i_g * g_g
            h_new = o_g * jnp.tanh(c_new)
            return h_new, c_new

        zero = jnp.zeros((B, H), jnp.float32)
        state = [zero] * (2 * num_layers)   # (h, c) per layer

        # T is small and static: fully static Python unroll keeps every slice static.
        for t in range(T):
            # Layer 0: only the serial h-dependent dot is on the critical path.
            pre0 = (x_proj[t * B:(t + 1) * B, :]
                    + jnp.dot(state[0], w_hh[0], preferred_element_type=jnp.float32))
            h0, c0 = cell(pre0, state[1])
            state[0], state[1] = h0, c0
            inp = h0
            for l in range(1, num_layers):
                pre = (jnp.dot(inp, w_ih[l], preferred_element_type=jnp.float32)
                       + jnp.dot(state[2 * l], w_hh[l], preferred_element_type=jnp.float32)
                       + bias[l])
                h, c = cell(pre, state[2 * l + 1])
                state[2 * l], state[2 * l + 1] = h, c
                inp = h
            # Stash top-layer h for the post-loop head (static slab store).
            h_all[t * B:(t + 1) * B, :] = inp

        # Output head once, after the recurrence: 1 matmul, 1 log-softmax, 1 exp,
        # lane-dense (C padded to 128) slab stores.  Softmax = exp(LogSoftmax).
        hs = h_all[...]                                             # (T*B, H)
        logits = (jnp.dot(hs, wout_ref[...], preferred_element_type=jnp.float32)
                  + jnp.broadcast_to(bout_ref[...], (T * B, C_pad)))
        z = logits - jnp.max(logits, axis=-1, keepdims=True)
        logsm = z - jnp.log(jnp.sum(jnp.exp(z), axis=-1, keepdims=True))
        logsm_ref[...] = logsm
        sm_ref[...] = jnp.exp(logsm)

    return kernel


def _full_block(a):
    nd = a.ndim
    return pl.BlockSpec(a.shape, lambda i, _nd=nd: (0,) * _nd)


def _pack_params(params, c_pad):
    """PyTorch-layout params -> packed, gate-fused, lane-dense kernel layout."""
    H = params["lstm"][0]["w_hh"].shape[1]
    w_list, b_list = [], []
    for layer in params["lstm"]:
        # (4H, D).T -> (D, 4H) keeps PyTorch's [i|f|g|o] gate column order.
        w_list.append(layer["w_ih"].T)
        w_list.append(layer["w_hh"].T)
        b_list.append((layer["b_ih"] + layer["b_hh"]).reshape(1, 4 * H))
    lstm_w = jnp.stack(w_list, axis=0)          # (2L, D, 4H)   (D_ENCODER == D_DECODER here)
    lstm_b = jnp.stack(b_list, axis=0)          # (L, 1, 4H)

    C = params["linear"]["w"].shape[0]
    w_out = params["linear"]["w"].T             # (H, C)
    # Pad the head to a full 128-lane output: zero weight columns + very negative bias
    # -> padded lanes get logsm=-1e30-ish, softmax=0, and are sliced off in the wrapper.
    w_out_pad = jnp.zeros((H, c_pad), jnp.float32).at[:, :C].set(w_out)
    b_out_pad = jnp.full((1, c_pad), -1e30, jnp.float32).at[0, :C].set(params["linear"]["b"])
    return lstm_w, lstm_b, w_out_pad, b_out_pad


@jax.jit
def decoder_forward(x, params):
    """x: (T, B, D_ENCODER) -> (log_softmax, softmax), each (T, B, NUM_CLASSES)."""
    T, B, D = x.shape
    H = params["lstm"][0]["w_hh"].shape[1]
    C = params["linear"]["w"].shape[0]
    num_layers = len(params["lstm"])
    C_pad = ((C + 127) // 128) * 128 if C > 128 else 128

    lstm_w, lstm_b, w_out_pad, b_out_pad = _pack_params(params, C_pad)
    x_flat = x.reshape(T * B, D)

    args = [x_flat, lstm_w, lstm_b, w_out_pad, b_out_pad]
    out_struct = jax.ShapeDtypeStruct((T * B, C_pad), jnp.float32)
    out_spec = pl.BlockSpec((T * B, C_pad), lambda i: (0, 0))

    logsm_pad, sm_pad = pl.pallas_call(
        _make_decoder_kernel(num_layers, T, B, D, H, C_pad),
        out_shape=(out_struct, out_struct),
        grid=(1,),
        in_specs=[_full_block(a) for a in args],
        out_specs=(out_spec, out_spec),
        scratch_shapes=[pltpu.VMEM((T * B, H), jnp.float32)],
        compiler_params=pltpu.CompilerParams(
            dimension_semantics=("arbitrary",)),
    )(*args)

    logsm = logsm_pad[:, :C].reshape(T, B, C)
    sm = sm_pad[:, :C].reshape(T, B, C)
    return logsm, sm


# ---------------------------------------------------------------------------
# Parameter construction (PyTorch nn.LSTM / nn.Linear layouts) + pure-JAX reference.
# ---------------------------------------------------------------------------
def init_params(key):
    H = D_DECODER
    scale = 1.0 / (H ** 0.5)
    params = {"lstm": []}
    d_in = D_ENCODER
    for _ in range(NUM_DECODER_LAYERS):
        key, k1, k2, k3, k4 = jax.random.split(key, 5)
        params["lstm"].append({
            "w_ih": jax.random.uniform(k1, (4 * H, d_in), jnp.float32, -scale, scale),
            "w_hh": jax.random.uniform(k2, (4 * H, H), jnp.float32, -scale, scale),
            "b_ih": jax.random.uniform(k3, (4 * H,), jnp.float32, -scale, scale),
            "b_hh": jax.random.uniform(k4, (4 * H,), jnp.float32, -scale, scale),
        })
        d_in = H
    key, k1, k2 = jax.random.split(key, 3)
    params["linear"] = {
        "w": jax.random.uniform(k1, (NUM_CLASSES, H), jnp.float32, -scale, scale),
        "b": jax.random.uniform(k2, (NUM_CLASSES,), jnp.float32, -scale, scale),
    }
    return params


def decoder_reference(x, params):
    """Pure-JAX mirror of the PyTorch module for a light correctness check."""
    h_seq = x
    for layer in params["lstm"]:
        T, B, _ = h_seq.shape
        H = layer["w_hh"].shape[1]
        b = layer["b_ih"] + layer["b_hh"]
        h_t = jnp.zeros((B, H), jnp.float32)
        c_t = jnp.zeros((B, H), jnp.float32)
        outs = []
        for t in range(T):
            pre = h_seq[t] @ layer["w_ih"].T + h_t @ layer["w_hh"].T + b
            i_g = jax.nn.sigmoid(pre[:, 0:H])
            f_g = jax.nn.sigmoid(pre[:, H:2 * H])
            g_g = jnp.tanh(pre[:, 2 * H:3 * H])
            o_g = jax.nn.sigmoid(pre[:, 3 * H:4 * H])
            c_t = f_g * c_t + i_g * g_g
            h_t = o_g * jnp.tanh(c_t)
            outs.append(h_t)
        h_seq = jnp.stack(outs, axis=0)
    logits = h_seq @ params["linear"]["w"].T + params["linear"]["b"]
    return jax.nn.log_softmax(logits, axis=2), jax.nn.softmax(logits, axis=2)


if __name__ == "__main__":
    key = jax.random.PRNGKey(0)
    key, kx = jax.random.split(key)
    x = jax.random.normal(kx, (SEQ_LEN, BATCH, D_ENCODER), jnp.float32)
    params = init_params(key)

    logsm, sm = jax.block_until_ready(decoder_forward(x, params))

    ref_logsm, ref_sm = decoder_reference(x, params)
    assert logsm.shape == (SEQ_LEN, BATCH, NUM_CLASSES)
    assert sm.shape == (SEQ_LEN, BATCH, NUM_CLASSES)
    assert jnp.allclose(logsm, ref_logsm, atol=2e-3, rtol=2e-3)
    assert jnp.allclose(sm, ref_sm, atol=2e-3, rtol=2e-3)

    print("KERNEL_OK")
</pallas_src>

<mosaic_0001>
module attributes {stable_mosaic.version = 11 : i64} {
  func.func @kernel(%arg0: i32, %arg1: memref<16x32xf32, #tpu.memory_space<vmem>>, %arg2: memref<4x32x128xf32, #tpu.memory_space<vmem>>, %arg3: memref<2x1x128xf32, #tpu.memory_space<vmem>>, %arg4: memref<32x128xf32, #tpu.memory_space<vmem>>, %arg5: memref<1x128xf32, #tpu.memory_space<vmem>>, %arg6: memref<16x128xf32, #tpu.memory_space<vmem>>, %arg7: memref<16x128xf32, #tpu.memory_space<vmem>>, %arg8: memref<16x32xf32, #tpu.memory_space<vmem>>) attributes {dimension_semantics = [#tpu.dimension_semantics<arbitrary>], iteration_bounds = array<i64: 1>, scalar_prefetch = 0 : i64, scratch_operands = 1 : i64, tpu.core_type = #tpu.core_type<tc>, window_params = [{pipeline_mode = #tpu.pipeline_mode<synchronous>, transform_indices = @transform_0, window_bounds = array<i64: 16, 32>}, {pipeline_mode = #tpu.pipeline_mode<synchronous>, transform_indices = @transform_1, window_bounds = array<i64: 4, 32, 128>}, {pipeline_mode = #tpu.pipeline_mode<synchronous>, transform_indices = @transform_2, window_bounds = array<i64: 2, 1, 128>}, {pipeline_mode = #tpu.pipeline_mode<synchronous>, transform_indices = @transform_3, window_bounds = array<i64: 32, 128>}, {pipeline_mode = #tpu.pipeline_mode<synchronous>, transform_indices = @transform_4, window_bounds = array<i64: 1, 128>}, {pipeline_mode = #tpu.pipeline_mode<synchronous>, transform_indices = @transform_5, window_bounds = array<i64: 16, 128>}, {pipeline_mode = #tpu.pipeline_mode<synchronous>, transform_indices = @transform_6, window_bounds = array<i64: 16, 128>}]} {
    %c0 = arith.constant 0 : index
    %c0_0 = arith.constant 0 : index
    %c0_1 = arith.constant 0 : index
    %0 = vector.load %arg2[%c0, %c0_0, %c0_1] : memref<4x32x128xf32, #tpu.memory_space<vmem>>, vector<1x32x128xf32>
    %1 = vector.shape_cast %0 : vector<1x32x128xf32> to vector<32x128xf32>
    %c2 = arith.constant 2 : index
    %c0_2 = arith.constant 0 : index
    %c0_3 = arith.constant 0 : index
    %2 = vector.load %arg2[%c2, %c0_2, %c0_3] : memref<4x32x128xf32, #tpu.memory_space<vmem>>, vector<1x32x128xf32>
    %3 = vector.shape_cast %2 : vector<1x32x128xf32> to vector<32x128xf32>
    %c1 = arith.constant 1 : index
    %c0_4 = arith.constant 0 : index
    %c0_5 = arith.constant 0 : index
    %4 = vector.load %arg2[%c1, %c0_4, %c0_5] : memref<4x32x128xf32, #tpu.memory_space<vmem>>, vector<1x32x128xf32>
    %5 = vector.shape_cast %4 : vector<1x32x128xf32> to vector<32x128xf32>
    %c3 = arith.constant 3 : index
    %c0_6 = arith.constant 0 : index
    %c0_7 = arith.constant 0 : index
    %6 = vector.load %arg2[%c3, %c0_6, %c0_7] : memref<4x32x128xf32, #tpu.memory_space<vmem>>, vector<1x32x128xf32>
    %7 = vector.shape_cast %6 : vector<1x32x128xf32> to vector<32x128xf32>
    %c1_8 = arith.constant 1 : index
    %c0_9 = arith.constant 0 : index
    %c0_10 = arith.constant 0 : index
    %8 = vector.load %arg3[%c1_8, %c0_9, %c0_10] : memref<2x1x128xf32, #tpu.memory_space<vmem>>, vector<1x1x128xf32>
    %9 = vector.shape_cast %8 : vector<1x1x128xf32> to vector<1x128xf32>
    %10 = vector.shape_cast %9 : vector<1x128xf32> to vector<1x128xf32>
    %11 = vector.broadcast %10 : vector<1x128xf32> to vector<2x128xf32>
    %c0_11 = arith.constant 0 : index
    %c0_12 = arith.constant 0 : index
    %12 = vector.load %arg1[%c0_11, %c0_12] : memref<16x32xf32, #tpu.memory_space<vmem>>, vector<16x32xf32>
    %cst = arith.constant dense<0.000000e+00> : vector<16x128xf32>
    %13 = tpu.matmul %12, %1, %cst {dimension_numbers = #tpu.dot_dimension_numbers<[1], [0], [0], [1], [0, 0, 1, 1], [], []>} : vector<16x32xf32>, vector<32x128xf32>, vector<16x128xf32> -> vector<16x128xf32>
    %c0_13 = arith.constant 0 : index
    %c0_14 = arith.constant 0 : index
    %c0_15 = arith.constant 0 : index
    %14 = vector.load %arg3[%c0_13, %c0_14, %c0_15] : memref<2x1x128xf32, #tpu.memory_space<vmem>>, vector<1x1x128xf32>
    %15 = vector.shape_cast %14 : vector<1x1x128xf32> to vector<1x128xf32>
    %16 = vector.shape_cast %15 : vector<1x128xf32> to vector<1x128xf32>
    %17 = vector.broadcast %16 : vector<1x128xf32> to vector<16x128xf32>
    %18 = arith.addf %13, %17 : vector<16x128xf32>
    %cst_16 = arith.constant 0.000000e+00 : f32
    %19 = vector.broadcast %cst_16 : f32 to vector<2x32xf32>
    %20 = vector.extract_strided_slice %18 {offsets = [0, 0], sizes = [2, 128], strides = [1, 1]} : vector<16x128xf32> to vector<2x128xf32>
    %cst_17 = arith.constant dense<0.000000e+00> : vector<2x128xf32>
    %21 = tpu.matmul %19, %5, %cst_17 {dimension_numbers = #tpu.dot_dimension_numbers<[1], [0], [0], [1], [0, 0, 1, 1], [], []>} : vector<2x32xf32>, vector<32x128xf32>, vector<2x128xf32> -> vector<2x128xf32>
    %22 = arith.addf %20, %21 : vector<2x128xf32>
    %23 = arith.negf %22 : vector<2x128xf32>
    %24 = math.exp %23 : vector<2x128xf32>
    %cst_18 = arith.constant 1.000000e+00 : f32
    %25 = vector.broadcast %cst_18 : f32 to vector<2x128xf32>
    %26 = arith.addf %25, %24 : vector<2x128xf32>
    %27 = arith.divf %25, %26 : vector<2x128xf32>
    %28 = math.tanh %22 : vector<2x128xf32>
    %29 = vector.extract_strided_slice %27 {offsets = [0, 0], sizes = [2, 32], strides = [1, 1]} : vector<2x128xf32> to vector<2x32xf32>
    %30 = vector.extract_strided_slice %27 {offsets = [0, 32], sizes = [2, 32], strides = [1, 1]} : vector<2x128xf32> to vector<2x32xf32>
    %31 = vector.extract_strided_slice %28 {offsets = [0, 64], sizes = [2, 32], strides = [1, 1]} : vector<2x128xf32> to vector<2x32xf32>
    %32 = vector.extract_strided_slice %27 {offsets = [0, 96], sizes = [2, 32], strides = [1, 1]} : vector<2x128xf32> to vector<2x32xf32>
    %33 = arith.mulf %30, %19 : vector<2x32xf32>
    %34 = arith.mulf %29, %31 : vector<2x32xf32>
    %35 = arith.addf %33, %34 : vector<2x32xf32>
    %36 = math.tanh %35 : vector<2x32xf32>
    %37 = arith.mulf %32, %36 : vector<2x32xf32>
    %cst_19 = arith.constant dense<0.000000e+00> : vector<2x128xf32>
    %38 = tpu.matmul %37, %3, %cst_19 {dimension_numbers = #tpu.dot_dimension_numbers<[1], [0], [0], [1], [0, 0, 1, 1], [], []>} : vector<2x32xf32>, vector<32x128xf32>, vector<2x128xf32> -> vector<2x128xf32>
    %cst_20 = arith.constant dense<0.000000e+00> : vector<2x128xf32>
    %39 = tpu.matmul %19, %7, %cst_20 {dimension_numbers = #tpu.dot_dimension_numbers<[1], [0], [0], [1], [0, 0, 1, 1], [], []>} : vector<2x32xf32>, vector<32x128xf32>, vector<2x128xf32> -> vector<2x128xf32>
    %40 = arith.addf %38, %39 : vector<2x128xf32>
    %41 = arith.addf %40, %11 : vector<2x128xf32>
    %42 = arith.negf %41 : vector<2x128xf32>
    %43 = math.exp %42 : vector<2x128xf32>
    %cst_21 = arith.constant 1.000000e+00 : f32
    %44 = vector.broadcast %cst_21 : f32 to vector<2x128xf32>
    %45 = arith.addf %44, %43 : vector<2x128xf32>
    %46 = arith.divf %44, %45 : vector<2x128xf32>
    %47 = math.tanh %41 : vector<2x128xf32>
    %48 = vector.extract_strided_slice %46 {offsets = [0, 0], sizes = [2, 32], strides = [1, 1]} : vector<2x128xf32> to vector<2x32xf32>
    %49 = vector.extract_strided_slice %46 {offsets = [0, 32], sizes = [2, 32], strides = [1, 1]} : vector<2x128xf32> to vector<2x32xf32>
    %50 = vector.extract_strided_slice %47 {offsets = [0, 64], sizes = [2, 32], strides = [1, 1]} : vector<2x128xf32> to vector<2x32xf32>
    %51 = vector.extract_strided_slice %46 {offsets = [0, 96], sizes = [2, 32], strides = [1, 1]} : vector<2x128xf32> to vector<2x32xf32>
    %52 = arith.mulf %49, %19 : vector<2x32xf32>
    %53 = arith.mulf %48, %50 : vector<2x32xf32>
    %54 = arith.addf %52, %53 : vector<2x32xf32>
    %55 = math.tanh %54 : vector<2x32xf32>
    %56 = arith.mulf %51, %55 : vector<2x32xf32>
    %c0_22 = arith.constant 0 : index
    %c0_23 = arith.constant 0 : index
    %57 = vector.load %arg8[%c0_22, %c0_23] : memref<16x32xf32, #tpu.memory_space<vmem>>, vector<2x32xf32>
    tpu.vector_store %arg8[%c0_22, %c0_23], %56 {strides = array<i32>} : memref<16x32xf32, #tpu.memory_space<vmem>>, vector<2x32xf32>,
    %58 = vector.extract_strided_slice %18 {offsets = [2, 0], sizes = [2, 128], strides = [1, 1]} : vector<16x128xf32> to vector<2x128xf32>
    %cst_24 = arith.constant dense<0.000000e+00> : vector<2x128xf32>
    %59 = tpu.matmul %37, %5, %cst_24 {dimension_numbers = #tpu.dot_dimension_numbers<[1], [0], [0], [1], [0, 0, 1, 1], [], []>} : vector<2x32xf32>, vector<32x128xf32>, vector<2x128xf32> -> vector<2x128xf32>
    %60 = arith.addf %58, %59 : vector<2x128xf32>
    %61 = arith.negf %60 : vector<2x128xf32>
    %62 = math.exp %61 : vector<2x128xf32>
    %cst_25 = arith.constant 1.000000e+00 : f32
    %63 = vector.broadcast %cst_25 : f32 to vector<2x128xf32>
    %64 = arith.addf %63, %62 : vector<2x128xf32>
    %65 = arith.divf %63, %64 : vector<2x128xf32>
    %66 = math.tanh %60 : vector<2x128xf32>
    %67 = vector.extract_strided_slice %65 {offsets = [0, 0], sizes = [2, 32], strides = [1, 1]} : vector<2x128xf32> to vector<2x32xf32>
    %68 = vector.extract_strided_slice %65 {offsets = [0, 32], sizes = [2, 32], strides = [1, 1]} : vector<2x128xf32> to vector<2x32xf32>
    %69 = vector.extract_strided_slice %66 {offsets = [0, 64], sizes = [2, 32], strides = [1, 1]} : vector<2x128xf32> to vector<2x32xf32>
    %70 = vector.extract_strided_slice %65 {offsets = [0, 96], sizes = [2, 32], strides = [1, 1]} : vector<2x128xf32> to vector<2x32xf32>
    %71 = arith.mulf %68, %35 : vector<2x32xf32>
    %72 = arith.mulf %67, %69 : vector<2x32xf32>
    %73 = arith.addf %71, %72 : vector<2x32xf32>
    %74 = math.tanh %73 : vector<2x32xf32>
    %75 = arith.mulf %70, %74 : vector<2x32xf32>
    %cst_26 = arith.constant dense<0.000000e+00> : vector<2x128xf32>
    %76 = tpu.matmul %75, %3, %cst_26 {dimension_numbers = #tpu.dot_dimension_numbers<[1], [0], [0], [1], [0, 0, 1, 1], [], []>} : vector<2x32xf32>, vector<32x128xf32>, vector<2x128xf32> -> vector<2x128xf32>
    %cst_27 = arith.constant dense<0.000000e+00> : vector<2x128xf32>
    %77 = tpu.matmul %56, %7, %cst_27 {dimension_numbers = #tpu.dot_dimension_numbers<[1], [0], [0], [1], [0, 0, 1, 1], [], []>} : vector<2x32xf32>, vector<32x128xf32>, vector<2x128xf32> -> vector<2x128xf32>
    %78 = arith.addf %76, %77 : vector<2x128xf32>
    %79 = arith.addf %78, %11 : vector<2x128xf32>
    %80 = arith.negf %79 : vector<2x128xf32>
    %81 = math.exp %80 : vector<2x128xf32>
    %cst_28 = arith.constant 1.000000e+00 : f32
    %82 = vector.broadcast %cst_28 : f32 to vector<2x128xf32>
    %83 = arith.addf %82, %81 : vector<2x128xf32>
    %84 = arith.divf %82, %83 : vector<2x128xf32>
    %85 = math.tanh %79 : vector<2x128xf32>
    %86 = vector.extract_strided_slice %84 {offsets = [0, 0], sizes = [2, 32], strides = [1, 1]} : vector<2x128xf32> to vector<2x32xf32>
    %87 = vector.extract_strided_slice %84 {offsets = [0, 32], sizes = [2, 32], strides = [1, 1]} : vector<2x128xf32> to vector<2x32xf32>
    %88 = vector.extract_strided_slice %85 {offsets = [0, 64], sizes = [2, 32], strides = [1, 1]} : vector<2x128xf32> to vector<2x32xf32>
    %89 = vector.extract_strided_slice %84 {offsets = [0, 96], sizes = [2, 32], strides = [1, 1]} : vector<2x128xf32> to vector<2x32xf32>
    %90 = arith.mulf %87, %54 : vector<2x32xf32>
    %91 = arith.mulf %86, %88 : vector<2x32xf32>
    %92 = arith.addf %90, %91 : vector<2x32xf32>
    %93 = math.tanh %92 : vector<2x32xf32>
    %94 = arith.mulf %89, %93 : vector<2x32xf32>
    %c2_29 = arith.constant 2 : index
    %c0_30 = arith.constant 0 : index
    %95 = vector.load %arg8[%c2_29, %c0_30] : memref<16x32xf32, #tpu.memory_space<vmem>>, vector<2x32xf32>
    tpu.vector_store %arg8[%c2_29, %c0_30], %94 {strides = array<i32>} : memref<16x32xf32, #tpu.memory_space<vmem>>, vector<2x32xf32>,
    %96 = vector.extract_strided_slice %18 {offsets = [4, 0], sizes = [2, 128], strides = [1, 1]} : vector<16x128xf32> to vector<2x128xf32>
    %cst_31 = arith.constant dense<0.000000e+00> : vector<2x128xf32>
    %97 = tpu.matmul %75, %5, %cst_31 {dimension_numbers = #tpu.dot_dimension_numbers<[1], [0], [0], [1], [0, 0, 1, 1], [], []>} : vector<2x32xf32>, vector<32x128xf32>, vector<2x128xf32> -> vector<2x128xf32>
    %98 = arith.addf %96, %97 : vector<2x128xf32>
    %99 = arith.negf %98 : vector<2x128xf32>
    %100 = math.exp %99 : vector<2x128xf32>
    %cst_32 = arith.constant 1.000000e+00 : f32
    %101 = vector.broadcast %cst_32 : f32 to vector<2x128xf32>
    %102 = arith.addf %101, %100 : vector<2x128xf32>
    %103 = arith.divf %101, %102 : vector<2x128xf32>
    %104 = math.tanh %98 : vector<2x128xf32>
    %105 = vector.extract_strided_slice %103 {offsets = [0, 0], sizes = [2, 32], strides = [1, 1]} : vector<2x128xf32> to vector<2x32xf32>
    %106 = vector.extract_strided_slice %103 {offsets = [0, 32], sizes = [2, 32], strides = [1, 1]} : vector<2x128xf32> to vector<2x32xf32>
    %107 = vector.extract_strided_slice %104 {offsets = [0, 64], sizes = [2, 32], strides = [1, 1]} : vector<2x128xf32> to vector<2x32xf32>
    %108 = vector.extract_strided_slice %103 {offsets = [0, 96], sizes = [2, 32], strides = [1, 1]} : vector<2x128xf32> to vector<2x32xf32>
    %109 = arith.mulf %106, %73 : vector<2x32xf32>
    %110 = arith.mulf %105, %107 : vector<2x32xf32>
    %111 = arith.addf %109, %110 : vector<2x32xf32>
    %112 = math.tanh %111 : vector<2x32xf32>
    %113 = arith.mulf %108, %112 : vector<2x32xf32>
    %cst_33 = arith.constant dense<0.000000e+00> : vector<2x128xf32>
    %114 = tpu.matmul %113, %3, %cst_33 {dimension_numbers = #tpu.dot_dimension_numbers<[1], [0], [0], [1], [0, 0, 1, 1], [], []>} : vector<2x32xf32>, vector<32x128xf32>, vector<2x128xf32> -> vector<2x128xf32>
    %cst_34 = arith.constant dense<0.000000e+00> : vector<2x128xf32>
    %115 = tpu.matmul %94, %7, %cst_34 {dimension_numbers = #tpu.dot_dimension_numbers<[1], [0], [0], [1], [0, 0, 1, 1], [], []>} : vector<2x32xf32>, vector<32x128xf32>, vector<2x128xf32> -> vector<2x128xf32>
    %116 = arith.addf %114, %115 : vector<2x128xf32>
    %117 = arith.addf %116, %11 : vector<2x128xf32>
    %118 = arith.negf %117 : vector<2x128xf32>
    %119 = math.exp %118 : vector<2x128xf32>
    %cst_35 = arith.constant 1.000000e+00 : f32
    %120 = vector.broadcast %cst_35 : f32 to vector<2x128xf32>
    %121 = arith.addf %120, %119 : vector<2x128xf32>
    %122 = arith.divf %120, %121 : vector<2x128xf32>
    %123 = math.tanh %117 : vector<2x128xf32>
    %124 = vector.extract_strided_slice %122 {offsets = [0, 0], sizes = [2, 32], strides = [1, 1]} : vector<2x128xf32> to vector<2x32xf32>
    %125 = vector.extract_strided_slice %122 {offsets = [0, 32], sizes = [2, 32], strides = [1, 1]} : vector<2x128xf32> to vector<2x32xf32>
    %126 = vector.extract_strided_slice %123 {offsets = [0, 64], sizes = [2, 32], strides = [1, 1]} : vector<2x128xf32> to vector<2x32xf32>
    %127 = vector.extract_strided_slice %122 {offsets = [0, 96], sizes = [2, 32], strides = [1, 1]} : vector<2x128xf32> to vector<2x32xf32>
    %128 = arith.mulf %125, %92 : vector<2x32xf32>
    %129 = arith.mulf %124, %126 : vector<2x32xf32>
    %130 = arith.addf %128, %129 : vector<2x32xf32>
    %131 = math.tanh %130 : vector<2x32xf32>
    %132 = arith.mulf %127, %131 : vector<2x32xf32>
    %c4 = arith.constant 4 : index
    %c0_36 = arith.constant 0 : index
    %133 = vector.load %arg8[%c4, %c0_36] : memref<16x32xf32, #tpu.memory_space<vmem>>, vector<2x32xf32>
    tpu.vector_store %arg8[%c4, %c0_36], %132 {strides = array<i32>} : memref<16x32xf32, #tpu.memory_space<vmem>>, vector<2x32xf32>,
    %134 = vector.extract_strided_slice %18 {offsets = [6, 0], sizes = [2, 128], strides = [1, 1]} : vector<16x128xf32> to vector<2x128xf32>
    %cst_37 = arith.constant dense<0.000000e+00> : vector<2x128xf32>
    %135 = tpu.matmul %113, %5, %cst_37 {dimension_numbers = #tpu.dot_dimension_numbers<[1], [0], [0], [1], [0, 0, 1, 1], [], []>} : vector<2x32xf32>, vector<32x128xf32>, vector<2x128xf32> -> vector<2x128xf32>
    %136 = arith.addf %134, %135 : vector<2x128xf32>
    %137 = arith.negf %136 : vector<2x128xf32>
    %138 = math.exp %137 : vector<2x128xf32>
    %cst_38 = arith.constant 1.000000e+00 : f32
    %139 = vector.broadcast %cst_38 : f32 to vector<2x128xf32>
    %140 = arith.addf %139, %138 : vector<2x128xf32>
    %141 = arith.divf %139, %140 : vector<2x128xf32>
    %142 = math.tanh %136 : vector<2x128xf32>
    %143 = vector.extract_strided_slice %141 {offsets = [0, 0], sizes = [2, 32], strides = [1, 1]} : vector<2x128xf32> to vector<2x32xf32>
    %144 = vector.extract_strided_slice %141 {offsets = [0, 32], sizes = [2, 32], strides = [1, 1]} : vector<2x128xf32> to vector<2x32xf32>
    %145 = vector.extract_strided_slice %142 {offsets = [0, 64], sizes = [2, 32], strides = [1, 1]} : vector<2x128xf32> to vector<2x32xf32>
    %146 = vector.extract_strided_slice %141 {offsets = [0, 96], sizes = [2, 32], strides = [1, 1]} : vector<2x128xf32> to vector<2x32xf32>
    %147 = arith.mulf %144, %111 : vector<2x32xf32>
    %148 = arith.mulf %143, %145 : vector<2x32xf32>
    %149 = arith.addf %147, %148 : vector<2x32xf32>
    %150 = math.tanh %149 : vector<2x32xf32>
    %151 = arith.mulf %146, %150 : vector<2x32xf32>
    %cst_39 = arith.constant dense<0.000000e+00> : vector<2x128xf32>
    %152 = tpu.matmul %151, %3, %cst_39 {dimension_numbers = #tpu.dot_dimension_numbers<[1], [0], [0], [1], [0, 0, 1, 1], [], []>} : vector<2x32xf32>, vector<32x128xf32>, vector<2x128xf32> -> vector<2x128xf32>
    %cst_40 = arith.constant dense<0.000000e+00> : vector<2x128xf32>
    %153 = tpu.matmul %132, %7, %cst_40 {dimension_numbers = #tpu.dot_dimension_numbers<[1], [0], [0], [1], [0, 0, 1, 1], [], []>} : vector<2x32xf32>, vector<32x128xf32>, vector<2x128xf32> -> vector<2x128xf32>
    %154 = arith.addf %152, %153 : vector<2x128xf32>
    %155 = arith.addf %154, %11 : vector<2x128xf32>
    %156 = arith.negf %155 : vector<2x128xf32>
    %157 = math.exp %156 : vector<2x128xf32>
    %cst_41 = arith.constant 1.000000e+00 : f32
    %158 = vector.broadcast %cst_41 : f32 to vector<2x128xf32>
    %159 = arith.addf %158, %157 : vector<2x128xf32>
    %160 = arith.divf %158, %159 : vector<2x128xf32>
    %161 = math.tanh %155 : vector<2x128xf32>
    %162 = vector.extract_strided_slice %160 {offsets = [0, 0], sizes = [2, 32], strides = [1, 1]} : vector<2x128xf32> to vector<2x32xf32>
    %163 = vector.extract_strided_slice %160 {offsets = [0, 32], sizes = [2, 32], strides = [1, 1]} : vector<2x128xf32> to vector<2x32xf32>
    %164 = vector.extract_strided_slice %161 {offsets = [0, 64], sizes = [2, 32], strides = [1, 1]} : vector<2x128xf32> to vector<2x32xf32>
    %165 = vector.extract_strided_slice %160 {offsets = [0, 96], sizes = [2, 32], strides = [1, 1]} : vector<2x128xf32> to vector<2x32xf32>
    %166 = arith.mulf %163, %130 : vector<2x32xf32>
    %167 = arith.mulf %162, %164 : vector<2x32xf32>
    %168 = arith.addf %166, %167 : vector<2x32xf32>
    %169 = math.tanh %168 : vector<2x32xf32>
    %170 = arith.mulf %165, %169 : vector<2x32xf32>
    %c6 = arith.constant 6 : index
    %c0_42 = arith.constant 0 : index
    %171 = vector.load %arg8[%c6, %c0_42] : memref<16x32xf32, #tpu.memory_space<vmem>>, vector<2x32xf32>
    tpu.vector_store %arg8[%c6, %c0_42], %170 {strides = array<i32>} : memref<16x32xf32, #tpu.memory_space<vmem>>, vector<2x32xf32>,
    %172 = vector.extract_strided_slice %18 {offsets = [8, 0], sizes = [2, 128], strides = [1, 1]} : vector<16x128xf32> to vector<2x128xf32>
    %cst_43 = arith.constant dense<0.000000e+00> : vector<2x128xf32>
    %173 = tpu.matmul %151, %5, %cst_43 {dimension_numbers = #tpu.dot_dimension_numbers<[1], [0], [0], [1], [0, 0, 1, 1], [], []>} : vector<2x32xf32>, vector<32x128xf32>, vector<2x128xf32> -> vector<2x128xf32>
    %174 = arith.addf %172, %173 : vector<2x128xf32>
    %175 = arith.negf %174 : vector<2x128xf32>
    %176 = math.exp %175 : vector<2x128xf32>
    %cst_44 = arith.constant 1.000000e+00 : f32
    %177 = vector.broadcast %cst_44 : f32 to vector<2x128xf32>
    %178 = arith.addf %177, %176 : vector<2x128xf32>
    %179 = arith.divf %177, %178 : vector<2x128xf32>
    %180 = math.tanh %174 : vector<2x128xf32>
    %181 = vector.extract_strided_slice %179 {offsets = [0, 0], sizes = [2, 32], strides = [1, 1]} : vector<2x128xf32> to vector<2x32xf32>
    %182 = vector.extract_strided_slice %179 {offsets = [0, 32], sizes = [2, 32], strides = [1, 1]} : vector<2x128xf32> to vector<2x32xf32>
    %183 = vector.extract_strided_slice %180 {offsets = [0, 64], sizes = [2, 32], strides = [1, 1]} : vector<2x128xf32> to vector<2x32xf32>
    %184 = vector.extract_strided_slice %179 {offsets = [0, 96], sizes = [2, 32], strides = [1, 1]} : vector<2x128xf32> to vector<2x32xf32>
    %185 = arith.mulf %182, %149 : vector<2x32xf32>
    %186 = arith.mulf %181, %183 : vector<2x32xf32>
    %187 = arith.addf %185, %186 : vector<2x32xf32>
    %188 = math.tanh %187 : vector<2x32xf32>
    %189 = arith.mulf %184, %188 : vector<2x32xf32>
    %cst_45 = arith.constant dense<0.000000e+00> : vector<2x128xf32>
    %190 = tpu.matmul %189, %3, %cst_45 {dimension_numbers = #tpu.dot_dimension_numbers<[1], [0], [0], [1], [0, 0, 1, 1], [], []>} : vector<2x32xf32>, vector<32x128xf32>, vector<2x128xf32> -> vector<2x128xf32>
    %cst_46 = arith.constant dense<0.000000e+00> : vector<2x128xf32>
    %191 = tpu.matmul %170, %7, %cst_46 {dimension_numbers = #tpu.dot_dimension_numbers<[1], [0], [0], [1], [0, 0, 1, 1], [], []>} : vector<2x32xf32>, vector<32x128xf32>, vector<2x128xf32> -> vector<2x128xf32>
    %192 = arith.addf %190, %191 : vector<2x128xf32>
    %193 = arith.addf %192, %11 : vector<2x128xf32>
    %194 = arith.negf %193 : vector<2x128xf32>
    %195 = math.exp %194 : vector<2x128xf32>
    %cst_47 = arith.constant 1.000000e+00 : f32
    %196 = vector.broadcast %cst_47 : f32 to vector<2x128xf32>
    %197 = arith.addf %196, %195 : vector<2x128xf32>
    %198 = arith.divf %196, %197 : vector<2x128xf32>
    %199 = math.tanh %193 : vector<2x128xf32>
    %200 = vector.extract_strided_slice %198 {offsets = [0, 0], sizes = [2, 32], strides = [1, 1]} : vector<2x128xf32> to vector<2x32xf32>
    %201 = vector.extract_strided_slice %198 {offsets = [0, 32], sizes = [2, 32], strides = [1, 1]} : vector<2x128xf32> to vector<2x32xf32>
    %202 = vector.extract_strided_slice %199 {offsets = [0, 64], sizes = [2, 32], strides = [1, 1]} : vector<2x128xf32> to vector<2x32xf32>
    %203 = vector.extract_strided_slice %198 {offsets = [0, 96], sizes = [2, 32], strides = [1, 1]} : vector<2x128xf32> to vector<2x32xf32>
    %204 = arith.mulf %201, %168 : vector<2x32xf32>
    %205 = arith.mulf %200, %202 : vector<2x32xf32>
    %206 = arith.addf %204, %205 : vector<2x32xf32>
    %207 = math.tanh %206 : vector<2x32xf32>
    %208 = arith.mulf %203, %207 : vector<2x32xf32>
    %c8 = arith.constant 8 : index
    %c0_48 = arith.constant 0 : index
    %209 = vector.load %arg8[%c8, %c0_48] : memref<16x32xf32, #tpu.memory_space<vmem>>, vector<2x32xf32>
    tpu.vector_store %arg8[%c8, %c0_48], %208 {strides = array<i32>} : memref<16x32xf32, #tpu.memory_space<vmem>>, vector<2x32xf32>,
    %210 = vector.extract_strided_slice %18 {offsets = [10, 0], sizes = [2, 128], strides = [1, 1]} : vector<16x128xf32> to vector<2x128xf32>
    %cst_49 = arith.constant dense<0.000000e+00> : vector<2x128xf32>
    %211 = tpu.matmul %189, %5, %cst_49 {dimension_numbers = #tpu.dot_dimension_numbers<[1], [0], [0], [1], [0, 0, 1, 1], [], []>} : vector<2x32xf32>, vector<32x128xf32>, vector<2x128xf32> -> vector<2x128xf32>
    %212 = arith.addf %210, %211 : vector<2x128xf32>
    %213 = arith.negf %212 : vector<2x128xf32>
    %214 = math.exp %213 : vector<2x128xf32>
    %cst_50 = arith.constant 1.000000e+00 : f32
    %215 = vector.broadcast %cst_50 : f32 to vector<2x128xf32>
    %216 = arith.addf %215, %214 : vector<2x128xf32>
    %217 = arith.divf %215, %216 : vector<2x128xf32>
    %218 = math.tanh %212 : vector<2x128xf32>
    %219 = vector.extract_strided_slice %217 {offsets = [0, 0], sizes = [2, 32], strides = [1, 1]} : vector<2x128xf32> to vector<2x32xf32>
    %220 = vector.extract_strided_slice %217 {offsets = [0, 32], sizes = [2, 32], strides = [1, 1]} : vector<2x128xf32> to vector<2x32xf32>
    %221 = vector.extract_strided_slice %218 {offsets = [0, 64], sizes = [2, 32], strides = [1, 1]} : vector<2x128xf32> to vector<2x32xf32>
    %222 = vector.extract_strided_slice %217 {offsets = [0, 96], sizes = [2, 32], strides = [1, 1]} : vector<2x128xf32> to vector<2x32xf32>
    %223 = arith.mulf %220, %187 : vector<2x32xf32>
    %224 = arith.mulf %219, %221 : vector<2x32xf32>
    %225 = arith.addf %223, %224 : vector<2x32xf32>
    %226 = math.tanh %225 : vector<2x32xf32>
    %227 = arith.mulf %222, %226 : vector<2x32xf32>
    %cst_51 = arith.constant dense<0.000000e+00> : vector<2x128xf32>
    %228 = tpu.matmul %227, %3, %cst_51 {dimension_numbers = #tpu.dot_dimension_numbers<[1], [0], [0], [1], [0, 0, 1, 1], [], []>} : vector<2x32xf32>, vector<32x128xf32>, vector<2x128xf32> -> vector<2x128xf32>
    %cst_52 = arith.constant dense<0.000000e+00> : vector<2x128xf32>
    %229 = tpu.matmul %208, %7, %cst_52 {dimension_numbers = #tpu.dot_dimension_numbers<[1], [0], [0], [1], [0, 0, 1, 1], [], []>} : vector<2x32xf32>, vector<32x128xf32>, vector<2x128xf32> -> vector<2x128xf32>
    %230 = arith.addf %228, %229 : vector<2x128xf32>
    %231 = arith.addf %230, %11 : vector<2x128xf32>
    %232 = arith.negf %231 : vector<2x128xf32>
    %233 = math.exp %232 : vector<2x128xf32>
    %cst_53 = arith.constant 1.000000e+00 : f32
    %234 = vector.broadcast %cst_53 : f32 to vector<2x128xf32>
    %235 = arith.addf %234, %233 : vector<2x128xf32>
    %236 = arith.divf %234, %235 : vector<2x128xf32>
    %237 = math.tanh %231 : vector<2x128xf32>
    %238 = vector.extract_strided_slice %236 {offsets = [0, 0], sizes = [2, 32], strides = [1, 1]} : vector<2x128xf32> to vector<2x32xf32>
    %239 = vector.extract_strided_slice %236 {offsets = [0, 32], sizes = [2, 32], strides = [1, 1]} : vector<2x128xf32> to vector<2x32xf32>
    %240 = vector.extract_strided_slice %237 {offsets = [0, 64], sizes = [2, 32], strides = [1, 1]} : vector<2x128xf32> to vector<2x32xf32>
    %241 = vector.extract_strided_slice %236 {offsets = [0, 96], sizes = [2, 32], strides = [1, 1]} : vector<2x128xf32> to vector<2x32xf32>
    %242 = arith.mulf %239, %206 : vector<2x32xf32>
    %243 = arith.mulf %238, %240 : vector<2x32xf32>
    %244 = arith.addf %242, %243 : vector<2x32xf32>
    %245 = math.tanh %244 : vector<2x32xf32>
    %246 = arith.mulf %241, %245 : vector<2x32xf32>
    %c10 = arith.constant 10 : index
    %c0_54 = arith.constant 0 : index
    %247 = vector.load %arg8[%c10, %c0_54] : memref<16x32xf32, #tpu.memory_space<vmem>>, vector<2x32xf32>
    tpu.vector_store %arg8[%c10, %c0_54], %246 {strides = array<i32>} : memref<16x32xf32, #tpu.memory_space<vmem>>, vector<2x32xf32>,
    %248 = vector.extract_strided_slice %18 {offsets = [12, 0], sizes = [2, 128], strides = [1, 1]} : vector<16x128xf32> to vector<2x128xf32>
    %cst_55 = arith.constant dense<0.000000e+00> : vector<2x128xf32>
    %249 = tpu.matmul %227, %5, %cst_55 {dimension_numbers = #tpu.dot_dimension_numbers<[1], [0], [0], [1], [0, 0, 1, 1], [], []>} : vector<2x32xf32>, vector<32x128xf32>, vector<2x128xf32> -> vector<2x128xf32>
    %250 = arith.addf %248, %249 : vector<2x128xf32>
    %251 = arith.negf %250 : vector<2x128xf32>
    %252 = math.exp %251 : vector<2x128xf32>
    %cst_56 = arith.constant 1.000000e+00 : f32
    %253 = vector.broadcast %cst_56 : f32 to vector<2x128xf32>
    %254 = arith.addf %253, %252 : vector<2x128xf32>
    %255 = arith.divf %253, %254 : vector<2x128xf32>
    %256 = math.tanh %250 : vector<2x128xf32>
    %257 = vector.extract_strided_slice %255 {offsets = [0, 0], sizes = [2, 32], strides = [1, 1]} : vector<2x128xf32> to vector<2x32xf32>
    %258 = vector.extract_strided_slice %255 {offsets = [0, 32], sizes = [2, 32], strides = [1, 1]} : vector<2x128xf32> to vector<2x32xf32>
    %259 = vector.extract_strided_slice %256 {offsets = [0, 64], sizes = [2, 32], strides = [1, 1]} : vector<2x128xf32> to vector<2x32xf32>
    %260 = vector.extract_strided_slice %255 {offsets = [0, 96], sizes = [2, 32], strides = [1, 1]} : vector<2x128xf32> to vector<2x32xf32>
    %261 = arith.mulf %258, %225 : vector<2x32xf32>
    %262 = arith.mulf %257, %259 : vector<2x32xf32>
    %263 = arith.addf %261, %262 : vector<2x32xf32>
    %264 = math.tanh %263 : vector<2x32xf32>
    %265 = arith.mulf %260, %264 : vector<2x32xf32>
    %cst_57 = arith.constant dense<0.000000e+00> : vector<2x128xf32>
    %266 = tpu.matmul %265, %3, %cst_57 {dimension_numbers = #tpu.dot_dimension_numbers<[1], [0], [0], [1], [0, 0, 1, 1], [], []>} : vector<2x32xf32>, vector<32x128xf32>, vector<2x128xf32> -> vector<2x128xf32>
    %cst_58 = arith.constant dense<0.000000e+00> : vector<2x128xf32>
    %267 = tpu.matmul %246, %7, %cst_58 {dimension_numbers = #tpu.dot_dimension_numbers<[1], [0], [0], [1], [0, 0, 1, 1], [], []>} : vector<2x32xf32>, vector<32x128xf32>, vector<2x128xf32> -> vector<2x128xf32>
    %268 = arith.addf %266, %267 : vector<2x128xf32>
    %269 = arith.addf %268, %11 : vector<2x128xf32>
    %270 = arith.negf %269 : vector<2x128xf32>
    %271 = math.exp %270 : vector<2x128xf32>
    %cst_59 = arith.constant 1.000000e+00 : f32
    %272 = vector.broadcast %cst_59 : f32 to vector<2x128xf32>
    %273 = arith.addf %272, %271 : vector<2x128xf32>
    %274 = arith.divf %272, %273 : vector<2x128xf32>
    %275 = math.tanh %269 : vector<2x128xf32>
    %276 = vector.extract_strided_slice %274 {offsets = [0, 0], sizes = [2, 32], strides = [1, 1]} : vector<2x128xf32> to vector<2x32xf32>
    %277 = vector.extract_strided_slice %274 {offsets = [0, 32], sizes = [2, 32], strides = [1, 1]} : vector<2x128xf32> to vector<2x32xf32>
    %278 = vector.extract_strided_slice %275 {offsets = [0, 64], sizes = [2, 32], strides = [1, 1]} : vector<2x128xf32> to vector<2x32xf32>
    %279 = vector.extract_strided_slice %274 {offsets = [0, 96], sizes = [2, 32], strides = [1, 1]} : vector<2x128xf32> to vector<2x32xf32>
    %280 = arith.mulf %277, %244 : vector<2x32xf32>
    %281 = arith.mulf %276, %278 : vector<2x32xf32>
    %282 = arith.addf %280, %281 : vector<2x32xf32>
    %283 = math.tanh %282 : vector<2x32xf32>
    %284 = arith.mulf %279, %283 : vector<2x32xf32>
    %c12 = arith.constant 12 : index
    %c0_60 = arith.constant 0 : index
    %285 = vector.load %arg8[%c12, %c0_60] : memref<16x32xf32, #tpu.memory_space<vmem>>, vector<2x32xf32>
    tpu.vector_store %arg8[%c12, %c0_60], %284 {strides = array<i32>} : memref<16x32xf32, #tpu.memory_space<vmem>>, vector<2x32xf32>,
    %286 = vector.extract_strided_slice %18 {offsets = [14, 0], sizes = [2, 128], strides = [1, 1]} : vector<16x128xf32> to vector<2x128xf32>
    %cst_61 = arith.constant dense<0.000000e+00> : vector<2x128xf32>
    %287 = tpu.matmul %265, %5, %cst_61 {dimension_numbers = #tpu.dot_dimension_numbers<[1], [0], [0], [1], [0, 0, 1, 1], [], []>} : vector<2x32xf32>, vector<32x128xf32>, vector<2x128xf32> -> vector<2x128xf32>
    %288 = arith.addf %286, %287 : vector<2x128xf32>
    %289 = arith.negf %288 : vector<2x128xf32>
    %290 = math.exp %289 : vector<2x128xf32>
    %cst_62 = arith.constant 1.000000e+00 : f32
    %291 = vector.broadcast %cst_62 : f32 to vector<2x128xf32>
    %292 = arith.addf %291, %290 : vector<2x128xf32>
    %293 = arith.divf %291, %292 : vector<2x128xf32>
    %294 = math.tanh %288 : vector<2x128xf32>
    %295 = vector.extract_strided_slice %293 {offsets = [0, 0], sizes = [2, 32], strides = [1, 1]} : vector<2x128xf32> to vector<2x32xf32>
    %296 = vector.extract_strided_slice %293 {offsets = [0, 32], sizes = [2, 32], strides = [1, 1]} : vector<2x128xf32> to vector<2x32xf32>
    %297 = vector.extract_strided_slice %294 {offsets = [0, 64], sizes = [2, 32], strides = [1, 1]} : vector<2x128xf32> to vector<2x32xf32>
    %298 = vector.extract_strided_slice %293 {offsets = [0, 96], sizes = [2, 32], strides = [1, 1]} : vector<2x128xf32> to vector<2x32xf32>
    %299 = arith.mulf %296, %263 : vector<2x32xf32>
    %300 = arith.mulf %295, %297 : vector<2x32xf32>
    %301 = arith.addf %299, %300 : vector<2x32xf32>
    %302 = math.tanh %301 : vector<2x32xf32>
    %303 = arith.mulf %298, %302 : vector<2x32xf32>
    %cst_63 = arith.constant dense<0.000000e+00> : vector<2x128xf32>
    %304 = tpu.matmul %303, %3, %cst_63 {dimension_numbers = #tpu.dot_dimension_numbers<[1], [0], [0], [1], [0, 0, 1, 1], [], []>} : vector<2x32xf32>, vector<32x128xf32>, vector<2x128xf32> -> vector<2x128xf32>
    %cst_64 = arith.constant dense<0.000000e+00> : vector<2x128xf32>
    %305 = tpu.matmul %284, %7, %cst_64 {dimension_numbers = #tpu.dot_dimension_numbers<[1], [0], [0], [1], [0, 0, 1, 1], [], []>} : vector<2x32xf32>, vector<32x128xf32>, vector<2x128xf32> -> vector<2x128xf32>
    %306 = arith.addf %304, %305 : vector<2x128xf32>
    %307 = arith.addf %306, %11 : vector<2x128xf32>
    %308 = arith.negf %307 : vector<2x128xf32>
    %309 = math.exp %308 : vector<2x128xf32>
    %cst_65 = arith.constant 1.000000e+00 : f32
    %310 = vector.broadcast %cst_65 : f32 to vector<2x128xf32>
    %311 = arith.addf %310, %309 : vector<2x128xf32>
    %312 = arith.divf %310, %311 : vector<2x128xf32>
    %313 = math.tanh %307 : vector<2x128xf32>
    %314 = vector.extract_strided_slice %312 {offsets = [0, 0], sizes = [2, 32], strides = [1, 1]} : vector<2x128xf32> to vector<2x32xf32>
    %315 = vector.extract_strided_slice %312 {offsets = [0, 32], sizes = [2, 32], strides = [1, 1]} : vector<2x128xf32> to vector<2x32xf32>
    %316 = vector.extract_strided_slice %313 {offsets = [0, 64], sizes = [2, 32], strides = [1, 1]} : vector<2x128xf32> to vector<2x32xf32>
    %317 = vector.extract_strided_slice %312 {offsets = [0, 96], sizes = [2, 32], strides = [1, 1]} : vector<2x128xf32> to vector<2x32xf32>
    %318 = arith.mulf %315, %282 : vector<2x32xf32>
    %319 = arith.mulf %314, %316 : vector<2x32xf32>
    %320 = arith.addf %318, %319 : vector<2x32xf32>
    %321 = math.tanh %320 : vector<2x32xf32>
    %322 = arith.mulf %317, %321 : vector<2x32xf32>
    %c14 = arith.constant 14 : index
    %c0_66 = arith.constant 0 : index
    %323 = vector.load %arg8[%c14, %c0_66] : memref<16x32xf32, #tpu.memory_space<vmem>>, vector<2x32xf32>
    tpu.vector_store %arg8[%c14, %c0_66], %322 {strides = array<i32>} : memref<16x32xf32, #tpu.memory_space<vmem>>, vector<2x32xf32>,
    %c0_67 = arith.constant 0 : index
    %c0_68 = arith.constant 0 : index
    %324 = vector.load %arg8[%c0_67, %c0_68] : memref<16x32xf32, #tpu.memory_space<vmem>>, vector<16x32xf32>
    %c0_69 = arith.constant 0 : index
    %c0_70 = arith.constant 0 : index
    %325 = vector.load %arg4[%c0_69, %c0_70] : memref<32x128xf32, #tpu.memory_space<vmem>>, vector<32x128xf32>
    %cst_71 = arith.constant dense<0.000000e+00> : vector<16x128xf32>
    %326 = tpu.matmul %324, %325, %cst_71 {dimension_numbers = #tpu.dot_dimension_numbers<[1], [0], [0], [1], [0, 0, 1, 1], [], []>} : vector<16x32xf32>, vector<32x128xf32>, vector<16x128xf32> -> vector<16x128xf32>
    %c0_72 = arith.constant 0 : index
    %c0_73 = arith.constant 0 : index
    %327 = vector.load %arg5[%c0_72, %c0_73] : memref<1x128xf32, #tpu.memory_space<vmem>>, vector<1x128xf32>
    %328 = vector.shape_cast %327 : vector<1x128xf32> to vector<1x128xf32>
    %329 = vector.broadcast %328 : vector<1x128xf32> to vector<16x128xf32>
    %330 = arith.addf %326, %329 : vector<16x128xf32>
    %cst_74 = arith.constant dense<0xFF800000> : vector<16xf32>
    %331 = vector.multi_reduction <maximumf>, %330, %cst_74 [1] : vector<16x128xf32> to vector<16xf32>
    %332 = vector.shape_cast %331 : vector<16xf32> to vector<16x1xf32>
    %333 = vector.broadcast %332 : vector<16x1xf32> to vector<16x128xf32>
    %334 = arith.subf %330, %333 : vector<16x128xf32>
    %335 = math.exp %334 : vector<16x128xf32>
    %cst_75 = arith.constant dense<0.000000e+00> : vector<16xf32>
    %336 = vector.multi_reduction <add>, %335, %cst_75 [1] : vector<16x128xf32> to vector<16xf32>
    %337 = vector.shape_cast %336 : vector<16xf32> to vector<16x1xf32>
    %338 = math.log %337 : vector<16x1xf32>
    %339 = vector.broadcast %338 : vector<16x1xf32> to vector<16x128xf32>
    %340 = arith.subf %334, %339 : vector<16x128xf32>
    %c0_76 = arith.constant 0 : index
    %c0_77 = arith.constant 0 : index
    %341 = vector.load %arg6[%c0_76, %c0_77] : memref<16x128xf32, #tpu.memory_space<vmem>>, vector<16x128xf32>
    tpu.vector_store %arg6[%c0_76, %c0_77], %340 {strides = array<i32>} : memref<16x128xf32, #tpu.memory_space<vmem>>, vector<16x128xf32>,
    %342 = math.exp %340 : vector<16x128xf32>
    %c0_78 = arith.constant 0 : index
    %c0_79 = arith.constant 0 : index
    %343 = vector.load %arg7[%c0_78, %c0_79] : memref<16x128xf32, #tpu.memory_space<vmem>>, vector<16x128xf32>
    tpu.vector_store %arg7[%c0_78, %c0_79], %342 {strides = array<i32>} : memref<16x128xf32, #tpu.memory_space<vmem>>, vector<16x128xf32>,
    return
  }
  func.func @transform_0(%arg0: i32) -> (i32, i32) {
    %c0_i32 = arith.constant 0 : i32
    %c0_i32_0 = arith.constant 0 : i32
    %c0_i32_1 = arith.constant 0 : i32
    return %c0_i32, %c0_i32_0 : i32, i32
  }
  func.func @transform_1(%arg0: i32) -> (i32, i32, i32) {
    %c0_i32 = arith.constant 0 : i32
    %c0_i32_0 = arith.constant 0 : i32
    %c0_i32_1 = arith.constant 0 : i32
    %c0_i32_2 = arith.constant 0 : i32
    return %c0_i32, %c0_i32_0, %c0_i32_1 : i32, i32, i32
  }
  func.func @transform_2(%arg0: i32) -> (i32, i32, i32) {
    %c0_i32 = arith.constant 0 : i32
    %c0_i32_0 = arith.constant 0 : i32
    %c0_i32_1 = arith.constant 0 : i32
    %c0_i32_2 = arith.constant 0 : i32
    return %c0_i32, %c0_i32_0, %c0_i32_1 : i32, i32, i32
  }
  func.func @transform_3(%arg0: i32) -> (i32, i32) {
    %c0_i32 = arith.constant 0 : i32
    %c0_i32_0 = arith.constant 0 : i32
    %c0_i32_1 = arith.constant 0 : i32
    return %c0_i32, %c0_i32_0 : i32, i32
  }
  func.func @transform_4(%arg0: i32) -> (i32, i32) {
    %c0_i32 = arith.constant 0 : i32
    %c0_i32_0 = arith.constant 0 : i32
    %c0_i32_1 = arith.constant 0 : i32
    return %c0_i32, %c0_i32_0 : i32, i32
  }
  func.func @transform_5(%arg0: i32) -> (i32, i32) {
    %c0_i32 = arith.constant 0 : i32
    %c0_i32_0 = arith.constant 0 : i32
    %c0_i32_1 = arith.constant 0 : i32
    return %c0_i32, %c0_i32_0 : i32, i32
  }
  func.func @transform_6(%arg0: i32) -> (i32, i32) {
    %c0_i32 = arith.constant 0 : i32
    %c0_i32_0 = arith.constant 0 : i32
    %c0_i32_1 = arith.constant 0 : i32
    return %c0_i32, %c0_i32_0 : i32, i32
  }
}

</mosaic_0001>

<llo_original>
// kernel: decoder_forward.1
$region0: #{decoder_forward.1}
  #allocation0 [shape = 'u32[]', space=smem, size = 0x4, offset = 0x4, fixed_abs, tag = 'smem constant byte address 0x4 - core index']
  #allocation1 [shape = 'u32[72,128]{1,0:T(1,128)}', space=vmem, size = 0x9000, scoped, tag = 'internal scratch']
  #allocation2 [shape = 'f32[16,32]{1,0:T(8,128)}', space=vmem, size = 0x2000, scoped, tag = 'scratch operand']
  %s0 = inlined_call_operand.vmem [shape: f32[16,32], index: 0, kind: input, shape index: {}]
  %s1 = inlined_call_operand.vmem [shape: f32[4,32,128], index: 1, kind: input, shape index: {}]
  %s2 = inlined_call_operand.vmem [shape: f32[2,1,128], index: 2, kind: input, shape index: {}]
  %s3 = inlined_call_operand.vmem [shape: f32[32,128], index: 3, kind: input, shape index: {}]
  %s4 = inlined_call_operand.vmem [shape: f32[1,128], index: 4, kind: input, shape index: {}]
  %s5 = inlined_call_operand.hbm [shape: f32[16,128], index: 5, kind: output, shape index: {0}]
  %s6 = inlined_call_operand.hbm [shape: f32[16,128], index: 6, kind: output, shape index: {1}]
  %7 = xla_tuple %s5, %s6
  %s8 = sld [smem:[#allocation0]]
  $region38: #{decoder_forward.1} parent=0
    _
  %s10 = ssub.s32 1, %s8
  %s11 = scalar_select 0, %s10, %s8
  $region1: #{decoder_forward.1} parent=0
    #allocation3 [shape = 'u8[8192]{0}', space=vmem, size = 0x2000, scoped, tag = 'output window, operand 0, single buffered']
    #allocation4 [shape = 's32[1]{0}', space=sflag, size = 0x4, scoped, tag = 'scoped memory for decoder_forward.1']
    #allocation5 [shape = 'u8[8192]{0}', space=vmem, size = 0x2000, scoped, tag = 'output window, operand 1, single buffered']
    #allocation6 [shape = 's32[1]{0}', space=sflag, size = 0x4, scoped, tag = 'scoped memory for decoder_forward.1']
    %12 = vsyncpa [#allocation4], 0
    %13 = vsyncpa [#allocation6], 0
    // Predicated region
    $region2: #{decoder_forward.1} parent=1 // pred_check
      _
    $region3: #{decoder_forward.1} parent=1 // pred_check_branch
      %15 = sbr.rel (0) target = $region5
    $region4: #{decoder_forward.1} parent=1 // pred_region
      _
    $region5: #{decoder_forward.1} parent=1 // pred_fallthru
      _
    // Predicated region
    $region6: #{decoder_forward.1} parent=1 // pred_check
      _
    $region7: #{decoder_forward.1} parent=1 // pred_check_branch
      %17 = sbr.rel (0) target = $region9
    $region8: #{decoder_forward.1} parent=1 // pred_region
      _
    $region9: #{decoder_forward.1} parent=1 // pred_fallthru
      _
    // Predicated region
    $region10: #{decoder_forward.1} parent=1 // pred_check
      _
    $region11: #{decoder_forward.1} parent=1 // pred_check_branch
      %19 = sbr.rel (0) target = $region13
    $region12: #{decoder_forward.1} parent=1 // pred_region
      _
    $region13: #{decoder_forward.1} parent=1 // pred_fallthru
      _
    // Predicated region
    $region14: #{decoder_forward.1} parent=1 // pred_check
      _
    $region15: #{decoder_forward.1} parent=1 // pred_check_branch
      %21 = sbr.rel (0) target = $region17
    $region16: #{decoder_forward.1} parent=1 // pred_region
      _
    $region17: #{decoder_forward.1} parent=1 // pred_fallthru
      _
    // Predicated region
    $region18: #{decoder_forward.1} parent=1 // pred_check
      _
    $region19: #{decoder_forward.1} parent=1 // pred_check_branch
      %23 = sbr.rel (0) target = $region21
    $region20: #{decoder_forward.1} parent=1 // pred_region
      _
    $region21: #{decoder_forward.1} parent=1 // pred_fallthru
      _
    %v24 = vld [vmem:[%s1] sm:$0xff]
    %v25 = vld [vmem:[%s1 + $0x8] sm:$0xff]
    %v26 = vld [vmem:[%s1 + $0x10] sm:$0xff]
    %v27 = vld [vmem:[%s1 + $0x18] sm:$0xff]
    %s28 = scalar_lea.vmem %s1, 64
    %v29 = vld [vmem:[%s28] sm:$0xff]
    %v30 = vld [vmem:[%s28 + $0x8] sm:$0xff]
    %v31 = vld [vmem:[%s28 + $0x10] sm:$0xff]
    %v32 = vld [vmem:[%s28 + $0x18] sm:$0xff]
    %s33 = scalar_lea.vmem %s1, 32
    %v34 = vld [vmem:[%s33] sm:$0xff]
    %v35 = vld [vmem:[%s33 + $0x8] sm:$0xff]
    %v36 = vld [vmem:[%s33 + $0x10] sm:$0xff]
    %v37 = vld [vmem:[%s33 + $0x18] sm:$0xff]
    %s38 = scalar_lea.vmem %s1, 96
    %v39 = vld [vmem:[%s38] sm:$0xff]
    %v40 = vld [vmem:[%s38 + $0x8] sm:$0xff]
    %v41 = vld [vmem:[%s38 + $0x10] sm:$0xff]
    %v42 = vld [vmem:[%s38 + $0x18] sm:$0xff]
    %s43 = scalar_lea.vmem %s2, 1
    %v44 = vld [vmem:[%s43] sm:$0x1]
    %v46 = vperm.slane %v44, 0
    %v48 = vld [vmem:[%s0] sm:$0xff]
    %v49 = vld [vmem:[%s0 + $0x8] sm:$0xff]
    %v50 = vld [vmem:[%s2] sm:$0x1]
    %v52 = vperm.slane %v50, 0
    %vm54 = vcmask 261120
    %v56 = vsel %vm54, %v48, 0
    %v59 = vsel %vm54, %v49, 0
    %61 = vmatpush.msra.mxu0 0.0
    %62 = vmatpush.msra.mxu0 0.0
    %63 = vmatpush.msra.mxu0 0.0
    %64 = vmatpush.msra.mxu0 0.0
    %65 = vmatpush.msra.mxu0 0.0
    %66 = vmatpush.msra.mxu0 0.0
    %67 = vmatpush.msra.mxu0 0.0
    %68 = vmatpush.msra.mxu0 0.0
    %69 = vmatpush.msra.mxu0 0.0
    %70 = vmatpush.msra.mxu0 0.0
    %71 = vmatpush.msra.mxu0 0.0
    %72 = vmatpush.msra.mxu0 0.0
    %73 = vmatpush.msra.mxu0 %v27
    %74 = vmatpush.msra.mxu0 %v26
    %75 = vmatpush.msra.mxu0 %v25
    %76 = vmatpush.msra.mxu0 %v24
    %77 = vmatmul.f32.gmra.mxu0 %v56
    %v78 = vpop.f32.mrf.mxu0
    %v79 = vadd.f32 %v52, %v78
    %80 = vmatmul.f32.gmra.mxu0 %v59
    %v81 = vpop.f32.mrf.mxu0
    %v82 = vadd.f32 %v52, %v81
    %83 = vdwg.mxu0
    %v85 = vsel %vm54, 0.0, 0
    %87 = vmatpush.msra.mxu0 0.0
    %88 = vmatpush.msra.mxu0 0.0
    %89 = vmatpush.msra.mxu0 0.0
    %90 = vmatpush.msra.mxu0 0.0
    %91 = vmatpush.msra.mxu0 0.0
    %92 = vmatpush.msra.mxu0 0.0
    %93 = vmatpush.msra.mxu0 0.0
    %94 = vmatpush.msra.mxu0 0.0
    %95 = vmatpush.msra.mxu0 0.0
    %96 = vmatpush.msra.mxu0 0.0
    %97 = vmatpush.msra.mxu0 0.0
    %98 = vmatpush.msra.mxu0 0.0
    %99 = vmatpush.msra.mxu0 %v37
    %100 = vmatpush.msra.mxu0 %v36
    %101 = vmatpush.msra.mxu0 %v35
    %102 = vmatpush.msra.mxu0 %v34
    %103 = vmatmul.f32.gmra.mxu0 %v85
    %v104 = vpop.f32.mrf.mxu0
    %v105 = vadd.f32 0.0, %v104
    %106 = vdwg.mxu0
    %v107 = vadd.f32 %v79, %v105
    %v108 = vxor.u32 %v107, 2147483648
    %v109 = vmul.f32 %v108, 1.442695
    %v110 = vpow.pop %v109
    %v111 = vadd.f32 %v110, 1.0
    %v112 = vrcp.pop %v111
    %v113 = vmul.f32 %v111, %v112
    %v114 = vsub.f32 1.0, %v113
    %v115 = vmul.f32 %v112, %v114
    %v116 = vadd.f32 %v112, %v115
    %vm117 = vweird.f32 %v111
    %vm118 = vweird.f32 %v112
    %vm119 = vmor %vm117, %vm118
    %v120 = vsel %vm119, %v112, %v116
    %v121 = vand.u32 2147483647, %v111
    %vm122 = vcmp.eq.f32.partialorder %v121, 8.507059e+37
    %v123 = vand.u32 %v111, 2147483648
    %v124 = vor.u32 1.1754944e-38, %v123
    %v125 = vsel %vm122, %v124, %v120
    %v126 = vmul.f32 1.0, %v125
    %v127 = vtanh.pop %v107
    %v128 = vmul.f32 %v126, 0.0
    %130 = vrot.lane.b32.xlu0 %v127, 64
    %v131 = vpop.permute.xlu0 %130
    %v133 = vmul.f32 %v126, %v131
    %135 = vrot.lane.b32.xlu0 %v133, 32
    %v136 = vpop.permute.xlu0 %135
    %v138 = vadd.f32 %v128, %v136
    %v139 = vtanh.pop %v138
    %141 = vrot.lane.b32.xlu0 %v139, 64
    %v142 = vpop.permute.xlu0 %141
    %v144 = vmul.f32 %v126, %v142
    %145 = vmatpush.msra.mxu0 0.0
    %146 = vmatpush.msra.mxu0 0.0
    %147 = vmatpush.msra.mxu0 0.0
    %148 = vmatpush.msra.mxu0 0.0
    %149 = vmatpush.msra.mxu0 0.0
    %150 = vmatpush.msra.mxu0 0.0
    %151 = vmatpush.msra.mxu0 0.0
    %152 = vmatpush.msra.mxu0 0.0
    %153 = vmatpush.msra.mxu0 0.0
    %154 = vmatpush.msra.mxu0 0.0
    %155 = vmatpush.msra.mxu0 0.0
    %156 = vmatpush.msra.mxu0 0.0
    %157 = vmatpush.msra.mxu0 %v42
    %158 = vmatpush.msra.mxu0 %v41
    %159 = vmatpush.msra.mxu0 %v40
    %160 = vmatpush.msra.mxu0 %v39
    %161 = vmatmul.f32.gmra.mxu0 %v85
    %v162 = vpop.f32.mrf.mxu0
    %v163 = vadd.f32 0.0, %v162
    %164 = vdwg.mxu0
    %166 = vrot.lane.b32.xlu0 %v144, 32
    %v167 = vpop.permute.xlu0 %166
    %v168 = vsel %vm54, %v167, 0
    %170 = vmatpush.msra.mxu0 0.0
    %171 = vmatpush.msra.mxu0 0.0
    %172 = vmatpush.msra.mxu0 0.0
    %173 = vmatpush.msra.mxu0 0.0
    %174 = vmatpush.msra.mxu0 0.0
    %175 = vmatpush.msra.mxu0 0.0
    %176 = vmatpush.msra.mxu0 0.0
    %177 = vmatpush.msra.mxu0 0.0
    %178 = vmatpush.msra.mxu0 0.0
    %179 = vmatpush.msra.mxu0 0.0
    %180 = vmatpush.msra.mxu0 0.0
    %181 = vmatpush.msra.mxu0 0.0
    %182 = vmatpush.msra.mxu0 %v32
    %183 = vmatpush.msra.mxu0 %v31
    %184 = vmatpush.msra.mxu0 %v30
    %185 = vmatpush.msra.mxu0 %v29
    %186 = vmatmul.f32.gmra.mxu0 %v168
    %v187 = vpop.f32.mrf.mxu0
    %v188 = vadd.f32 %v163, %v187
    %189 = vdwg.mxu0
    %v190 = vadd.f32 %v188, %v46
    %v191 = vxor.u32 %v190, 2147483648
    %v192 = vmul.f32 %v191, 1.442695
    %v193 = vpow.pop %v192
    %v194 = vadd.f32 %v193, 1.0
    %v195 = vrcp.pop %v194
    %v196 = vmul.f32 %v194, %v195
    %v197 = vsub.f32 1.0, %v196
    %v198 = vmul.f32 %v195, %v197
    %v199 = vadd.f32 %v195, %v198
    %vm200 = vweird.f32 %v194
    %vm201 = vweird.f32 %v195
    %vm202 = vmor %vm200, %vm201
    %v203 = vsel %vm202, %v195, %v199
    %v204 = vand.u32 2147483647, %v194
    %vm205 = vcmp.eq.f32.partialorder %v204, 8.507059e+37
    %v206 = vand.u32 %v194, 2147483648
    %v207 = vor.u32 1.1754944e-38, %v206
    %v208 = vsel %vm205, %v207, %v203
    %v209 = vmul.f32 1.0, %v208
    %v210 = vtanh.pop %v190
    %v211 = vmul.f32 %v209, 0.0
    %213 = vrot.lane.b32.xlu0 %v210, 64
    %v214 = vpop.permute.xlu0 %213
    %v216 = vmul.f32 %v209, %v214
    %218 = vrot.lane.b32.xlu0 %v216, 32
    %v219 = vpop.permute.xlu0 %218
    %v221 = vadd.f32 %v211, %v219
    %v222 = vtanh.pop %v221
    %224 = vrot.lane.b32.xlu0 %v222, 64
    %v225 = vpop.permute.xlu0 %224
    %v227 = vmul.f32 %v209, %v225
    %229 = vrot.lane.b32.xlu0 %v227, 32
    %v230 = vpop.permute.xlu0 %229
    %vm232 = vcmask 254976
    %233 = vst.msk [vmem:[#allocation2] sm:$0x3] %vm232, %v230
    %234 = vmatpush.msra.mxu0 0.0
    %235 = vmatpush.msra.mxu0 0.0
    %236 = vmatpush.msra.mxu0 0.0
    %237 = vmatpush.msra.mxu0 0.0
    %238 = vmatpush.msra.mxu0 0.0
    %239 = vmatpush.msra.mxu0 0.0
    %240 = vmatpush.msra.mxu0 0.0
    %241 = vmatpush.msra.mxu0 0.0
    %242 = vmatpush.msra.mxu0 0.0
    %243 = vmatpush.msra.mxu0 0.0
    %244 = vmatpush.msra.mxu0 0.0
    %245 = vmatpush.msra.mxu0 0.0
    %246 = vmatpush.msra.mxu0 %v37
    %247 = vmatpush.msra.mxu0 %v36
    %248 = vmatpush.msra.mxu0 %v35
    %249 = vmatpush.msra.mxu0 %v34
    %250 = vmatmul.f32.gmra.mxu0 %v168
    %v251 = vpop.f32.mrf.mxu0
    %v252 = vadd.f32 0.0, %v251
    %253 = vdwg.mxu0
    %v255 = vrot.slane %v252, 6
    %v257 = vadd.f32 %v79, %v255
    %v258 = vxor.u32 %v257, 2147483648
    %v259 = vmul.f32 %v258, 1.442695
    %v260 = vpow.pop %v259
    %v261 = vadd.f32 %v260, 1.0
    %v262 = vrcp.pop %v261
    %v263 = vmul.f32 %v261, %v262
    %v264 = vsub.f32 1.0, %v263
    %v265 = vmul.f32 %v262, %v264
    %v266 = vadd.f32 %v262, %v265
    %vm267 = vweird.f32 %v261
    %vm268 = vweird.f32 %v262
    %vm269 = vmor %vm267, %vm268
    %v270 = vsel %vm269, %v262, %v266
    %v271 = vand.u32 2147483647, %v261
    %vm272 = vcmp.eq.f32.partialorder %v271, 8.507059e+37
    %v273 = vand.u32 %v261, 2147483648
    %v274 = vor.u32 1.1754944e-38, %v273
    %v275 = vsel %vm272, %v274, %v270
    %v276 = vmul.f32 1.0, %v275
    %v277 = vtanh.pop %v257
    %v279 = vrot.slane %v138, 6
    %v281 = vmul.f32 %v276, %v279
    %283 = vrot.lane.b32.xlu0 %v277, 64
    %v284 = vpop.permute.xlu0 %283
    %v286 = vmul.f32 %v276, %v284
    %288 = vrot.lane.b32.xlu0 %v286, 32
    %v289 = vpop.permute.xlu0 %288
    %v291 = vadd.f32 %v281, %v289
    %v292 = vtanh.pop %v291
    %294 = vrot.lane.b32.xlu0 %v292, 64
    %v295 = vpop.permute.xlu0 %294
    %v297 = vmul.f32 %v276, %v295
    %v298 = vsel %vm54, %v230, 0
    %300 = vmatpush.msra.mxu0 0.0
    %301 = vmatpush.msra.mxu0 0.0
    %302 = vmatpush.msra.mxu0 0.0
    %303 = vmatpush.msra.mxu0 0.0
    %304 = vmatpush.msra.mxu0 0.0
    %305 = vmatpush.msra.mxu0 0.0
    %306 = vmatpush.msra.mxu0 0.0
    %307 = vmatpush.msra.mxu0 0.0
    %308 = vmatpush.msra.mxu0 0.0
    %309 = vmatpush.msra.mxu0 0.0
    %310 = vmatpush.msra.mxu0 0.0
    %311 = vmatpush.msra.mxu0 0.0
    %312 = vmatpush.msra.mxu0 %v42
    %313 = vmatpush.msra.mxu0 %v41
    %314 = vmatpush.msra.mxu0 %v40
    %315 = vmatpush.msra.mxu0 %v39
    %316 = vmatmul.f32.gmra.mxu0 %v298
    %v317 = vpop.f32.mrf.mxu0
    %v318 = vadd.f32 0.0, %v317
    %319 = vdwg.mxu0
    %v321 = vrot.slane %v297, 2
    %322 = vrot.lane.b32.xlu0 %v321, 32
    %v323 = vpop.permute.xlu0 %322
    %v324 = vsel %vm54, %v323, 0
    %326 = vmatpush.msra.mxu0 0.0
    %327 = vmatpush.msra.mxu0 0.0
    %328 = vmatpush.msra.mxu0 0.0
    %329 = vmatpush.msra.mxu0 0.0
    %330 = vmatpush.msra.mxu0 0.0
    %331 = vmatpush.msra.mxu0 0.0
    %332 = vmatpush.msra.mxu0 0.0
    %333 = vmatpush.msra.mxu0 0.0
    %334 = vmatpush.msra.mxu0 0.0
    %335 = vmatpush.msra.mxu0 0.0
    %336 = vmatpush.msra.mxu0 0.0
    %337 = vmatpush.msra.mxu0 0.0
    %338 = vmatpush.msra.mxu0 %v32
    %339 = vmatpush.msra.mxu0 %v31
    %340 = vmatpush.msra.mxu0 %v30
    %341 = vmatpush.msra.mxu0 %v29
    %342 = vmatmul.f32.gmra.mxu0 %v324
    %v343 = vpop.f32.mrf.mxu0
    %v344 = vadd.f32 %v318, %v343
    %345 = vdwg.mxu0
    %v346 = vadd.f32 %v344, %v46
    %v347 = vxor.u32 %v346, 2147483648
    %v348 = vmul.f32 %v347, 1.442695
    %v349 = vpow.pop %v348
    %v350 = vadd.f32 %v349, 1.0
    %v351 = vrcp.pop %v350
    %v352 = vmul.f32 %v350, %v351
    %v353 = vsub.f32 1.0, %v352
    %v354 = vmul.f32 %v351, %v353
    %v355 = vadd.f32 %v351, %v354
    %vm356 = vweird.f32 %v350
    %vm357 = vweird.f32 %v351
    %vm358 = vmor %vm356, %vm357
    %v359 = vsel %vm358, %v351, %v355
    %v360 = vand.u32 2147483647, %v350
    %vm361 = vcmp.eq.f32.partialorder %v360, 8.507059e+37
    %v362 = vand.u32 %v350, 2147483648
    %v363 = vor.u32 1.1754944e-38, %v362
    %v364 = vsel %vm361, %v363, %v359
    %v365 = vmul.f32 1.0, %v364
    %v366 = vtanh.pop %v346
    %v367 = vmul.f32 %v365, %v221
    %369 = vrot.lane.b32.xlu0 %v366, 64
    %v370 = vpop.permute.xlu0 %369
    %v372 = vmul.f32 %v365, %v370
    %374 = vrot.lane.b32.xlu0 %v372, 32
    %v375 = vpop.permute.xlu0 %374
    %v377 = vadd.f32 %v367, %v375
    %v378 = vtanh.pop %v377
    %380 = vrot.lane.b32.xlu0 %v378, 64
    %v381 = vpop.permute.xlu0 %380
    %v383 = vmul.f32 %v365, %v381
    %385 = vrot.lane.b32.xlu0 %v383, 32
    %v386 = vpop.permute.xlu0 %385
    %388 = vst.msk [vmem:[#allocation2 + $0x2] sm:$0x3] %vm232, %v386
    %389 = vmatpush.msra.mxu0 0.0
    %390 = vmatpush.msra.mxu0 0.0
    %391 = vmatpush.msra.mxu0 0.0
    %392 = vmatpush.msra.mxu0 0.0
    %393 = vmatpush.msra.mxu0 0.0
    %394 = vmatpush.msra.mxu0 0.0
    %395 = vmatpush.msra.mxu0 0.0
    %396 = vmatpush.msra.mxu0 0.0
    %397 = vmatpush.msra.mxu0 0.0
    %398 = vmatpush.msra.mxu0 0.0
    %399 = vmatpush.msra.mxu0 0.0
    %400 = vmatpush.msra.mxu0 0.0
    %401 = vmatpush.msra.mxu0 %v37
    %402 = vmatpush.msra.mxu0 %v36
    %403 = vmatpush.msra.mxu0 %v35
    %404 = vmatpush.msra.mxu0 %v34
    %405 = vmatmul.f32.gmra.mxu0 %v324
    %v406 = vpop.f32.mrf.mxu0
    %v407 = vadd.f32 0.0, %v406
    %408 = vdwg.mxu0
    %v410 = vrot.slane %v407, 4
    %v412 = vadd.f32 %v79, %v410
    %v413 = vxor.u32 %v412, 2147483648
    %v414 = vmul.f32 %v413, 1.442695
    %v415 = vpow.pop %v414
    %v416 = vadd.f32 %v415, 1.0
    %v417 = vrcp.pop %v416
    %v418 = vmul.f32 %v416, %v417
    %v419 = vsub.f32 1.0, %v418
    %v420 = vmul.f32 %v417, %v419
    %v421 = vadd.f32 %v417, %v420
    %vm422 = vweird.f32 %v416
    %vm423 = vweird.f32 %v417
    %vm424 = vmor %vm422, %vm423
    %v425 = vsel %vm424, %v417, %v421
    %v426 = vand.u32 2147483647, %v416
    %vm427 = vcmp.eq.f32.partialorder %v426, 8.507059e+37
    %v428 = vand.u32 %v416, 2147483648
    %v429 = vor.u32 1.1754944e-38, %v428
    %v430 = vsel %vm427, %v429, %v425
    %v431 = vmul.f32 1.0, %v430
    %v432 = vtanh.pop %v412
    %v434 = vrot.slane %v291, 6
    %v436 = vmul.f32 %v431, %v434
    %438 = vrot.lane.b32.xlu0 %v432, 64
    %v439 = vpop.permute.xlu0 %438
    %v441 = vmul.f32 %v431, %v439
    %443 = vrot.lane.b32.xlu0 %v441, 32
    %v444 = vpop.permute.xlu0 %443
    %v446 = vadd.f32 %v436, %v444
    %v447 = vtanh.pop %v446
    %449 = vrot.lane.b32.xlu0 %v447, 64
    %v450 = vpop.permute.xlu0 %449
    %v452 = vmul.f32 %v431, %v450
    %v453 = vsel %vm54, %v386, 0
    %455 = vmatpush.msra.mxu0 0.0
    %456 = vmatpush.msra.mxu0 0.0
    %457 = vmatpush.msra.mxu0 0.0
    %458 = vmatpush.msra.mxu0 0.0
    %459 = vmatpush.msra.mxu0 0.0
    %460 = vmatpush.msra.mxu0 0.0
    %461 = vmatpush.msra.mxu0 0.0
    %462 = vmatpush.msra.mxu0 0.0
    %463 = vmatpush.msra.mxu0 0.0
    %464 = vmatpush.msra.mxu0 0.0
    %465 = vmatpush.msra.mxu0 0.0
    %466 = vmatpush.msra.mxu0 0.0
    %467 = vmatpush.msra.mxu0 %v42
    %468 = vmatpush.msra.mxu0 %v41
    %469 = vmatpush.msra.mxu0 %v40
    %470 = vmatpush.msra.mxu0 %v39
    %471 = vmatmul.f32.gmra.mxu0 %v453
    %v472 = vpop.f32.mrf.mxu0
    %v473 = vadd.f32 0.0, %v472
    %474 = vdwg.mxu0
    %v476 = vrot.slane %v452, 4
    %477 = vrot.lane.b32.xlu0 %v476, 32
    %v478 = vpop.permute.xlu0 %477
    %v479 = vsel %vm54, %v478, 0
    %481 = vmatpush.msra.mxu0 0.0
    %482 = vmatpush.msra.mxu0 0.0
    %483 = vmatpush.msra.mxu0 0.0
    %484 = vmatpush.msra.mxu0 0.0
    %485 = vmatpush.msra.mxu0 0.0
    %486 = vmatpush.msra.mxu0 0.0
    %487 = vmatpush.msra.mxu0 0.0
    %488 = vmatpush.msra.mxu0 0.0
    %489 = vmatpush.msra.mxu0 0.0
    %490 = vmatpush.msra.mxu0 0.0
    %491 = vmatpush.msra.mxu0 0.0
    %492 = vmatpush.msra.mxu0 0.0
    %493 = vmatpush.msra.mxu0 %v32
    %494 = vmatpush.msra.mxu0 %v31
    %495 = vmatpush.msra.mxu0 %v30
    %496 = vmatpush.msra.mxu0 %v29
    %497 = vmatmul.f32.gmra.mxu0 %v479
    %v498 = vpop.f32.mrf.mxu0
    %v499 = vadd.f32 %v473, %v498
    %500 = vdwg.mxu0
    %v501 = vadd.f32 %v499, %v46
    %v502 = vxor.u32 %v501, 2147483648
    %v503 = vmul.f32 %v502, 1.442695
    %v504 = vpow.pop %v503
    %v505 = vadd.f32 %v504, 1.0
    %v506 = vrcp.pop %v505
    %v507 = vmul.f32 %v505, %v506
    %v508 = vsub.f32 1.0, %v507
    %v509 = vmul.f32 %v506, %v508
    %v510 = vadd.f32 %v506, %v509
    %vm511 = vweird.f32 %v505
    %vm512 = vweird.f32 %v506
    %vm513 = vmor %vm511, %vm512
    %v514 = vsel %vm513, %v506, %v510
    %v515 = vand.u32 2147483647, %v505
    %vm516 = vcmp.eq.f32.partialorder %v515, 8.507059e+37
    %v517 = vand.u32 %v505, 2147483648
    %v518 = vor.u32 1.1754944e-38, %v517
    %v519 = vsel %vm516, %v518, %v514
    %v520 = vmul.f32 1.0, %v519
    %v521 = vtanh.pop %v501
    %v522 = vmul.f32 %v520, %v377
    %524 = vrot.lane.b32.xlu0 %v521, 64
    %v525 = vpop.permute.xlu0 %524
    %v527 = vmul.f32 %v520, %v525
    %529 = vrot.lane.b32.xlu0 %v527, 32
    %v530 = vpop.permute.xlu0 %529
    %v532 = vadd.f32 %v522, %v530
    %v533 = vtanh.pop %v532
    %535 = vrot.lane.b32.xlu0 %v533, 64
    %v536 = vpop.permute.xlu0 %535
    %v538 = vmul.f32 %v520, %v536
    %540 = vrot.lane.b32.xlu0 %v538, 32
    %v541 = vpop.permute.xlu0 %540
    %543 = vst.msk [vmem:[#allocation2 + $0x4] sm:$0x3] %vm232, %v541
    %544 = vmatpush.msra.mxu0 0.0
    %545 = vmatpush.msra.mxu0 0.0
    %546 = vmatpush.msra.mxu0 0.0
    %547 = vmatpush.msra.mxu0 0.0
    %548 = vmatpush.msra.mxu0 0.0
    %549 = vmatpush.msra.mxu0 0.0
    %550 = vmatpush.msra.mxu0 0.0
    %551 = vmatpush.msra.mxu0 0.0
    %552 = vmatpush.msra.mxu0 0.0
    %553 = vmatpush.msra.mxu0 0.0
    %554 = vmatpush.msra.mxu0 0.0
    %555 = vmatpush.msra.mxu0 0.0
    %556 = vmatpush.msra.mxu0 %v37
    %557 = vmatpush.msra.mxu0 %v36
    %558 = vmatpush.msra.mxu0 %v35
    %559 = vmatpush.msra.mxu0 %v34
    %560 = vmatmul.f32.gmra.mxu0 %v479
    %v561 = vpop.f32.mrf.mxu0
    %v562 = vadd.f32 0.0, %v561
    %563 = vdwg.mxu0
    %v565 = vrot.slane %v562, 2
    %v567 = vadd.f32 %v79, %v565
    %v568 = vxor.u32 %v567, 2147483648
    %v569 = vmul.f32 %v568, 1.442695
    %v570 = vpow.pop %v569
    %v571 = vadd.f32 %v570, 1.0
    %v572 = vrcp.pop %v571
    %v573 = vmul.f32 %v571, %v572
    %v574 = vsub.f32 1.0, %v573
    %v575 = vmul.f32 %v572, %v574
    %v576 = vadd.f32 %v572, %v575
    %vm577 = vweird.f32 %v571
    %vm578 = vweird.f32 %v572
    %vm579 = vmor %vm577, %vm578
    %v580 = vsel %vm579, %v572, %v576
    %v581 = vand.u32 2147483647, %v571
    %vm582 = vcmp.eq.f32.partialorder %v581, 8.507059e+37
    %v583 = vand.u32 %v571, 2147483648
    %v584 = vor.u32 1.1754944e-38, %v583
    %v585 = vsel %vm582, %v584, %v580
    %v586 = vmul.f32 1.0, %v585
    %v587 = vtanh.pop %v567
    %v589 = vrot.slane %v446, 6
    %v591 = vmul.f32 %v586, %v589
    %593 = vrot.lane.b32.xlu0 %v587, 64
    %v594 = vpop.permute.xlu0 %593
    %v596 = vmul.f32 %v586, %v594
    %598 = vrot.lane.b32.xlu0 %v596, 32
    %v599 = vpop.permute.xlu0 %598
    %v601 = vadd.f32 %v591, %v599
    %v602 = vtanh.pop %v601
    %604 = vrot.lane.b32.xlu0 %v602, 64
    %v605 = vpop.permute.xlu0 %604
    %v607 = vmul.f32 %v586, %v605
    %v608 = vsel %vm54, %v541, 0
    %610 = vmatpush.msra.mxu0 0.0
    %611 = vmatpush.msra.mxu0 0.0
    %612 = vmatpush.msra.mxu0 0.0
    %613 = vmatpush.msra.mxu0 0.0
    %614 = vmatpush.msra.mxu0 0.0
    %615 = vmatpush.msra.mxu0 0.0
    %616 = vmatpush.msra.mxu0 0.0
    %617 = vmatpush.msra.mxu0 0.0
    %618 = vmatpush.msra.mxu0 0.0
    %619 = vmatpush.msra.mxu0 0.0
    %620 = vmatpush.msra.mxu0 0.0
    %621 = vmatpush.msra.mxu0 0.0
    %622 = vmatpush.msra.mxu0 %v42
    %623 = vmatpush.msra.mxu0 %v41
    %624 = vmatpush.msra.mxu0 %v40
    %625 = vmatpush.msra.mxu0 %v39
    %626 = vmatmul.f32.gmra.mxu0 %v608
    %v627 = vpop.f32.mrf.mxu0
    %v628 = vadd.f32 0.0, %v627
    %629 = vdwg.mxu0
    %v631 = vrot.slane %v607, 6
    %632 = vrot.lane.b32.xlu0 %v631, 32
    %v633 = vpop.permute.xlu0 %632
    %v634 = vsel %vm54, %v633, 0
    %636 = vmatpush.msra.mxu0 0.0
    %637 = vmatpush.msra.mxu0 0.0
    %638 = vmatpush.msra.mxu0 0.0
    %639 = vmatpush.msra.mxu0 0.0
    %640 = vmatpush.msra.mxu0 0.0
    %641 = vmatpush.msra.mxu0 0.0
    %642 = vmatpush.msra.mxu0 0.0
    %643 = vmatpush.msra.mxu0 0.0
    %644 = vmatpush.msra.mxu0 0.0
    %645 = vmatpush.msra.mxu0 0.0
    %646 = vmatpush.msra.mxu0 0.0
    %647 = vmatpush.msra.mxu0 0.0
    %648 = vmatpush.msra.mxu0 %v32
    %649 = vmatpush.msra.mxu0 %v31
    %650 = vmatpush.msra.mxu0 %v30
    %651 = vmatpush.msra.mxu0 %v29
    %652 = vmatmul.f32.gmra.mxu0 %v634
    %v653 = vpop.f32.mrf.mxu0
    %v654 = vadd.f32 %v628, %v653
    %655 = vdwg.mxu0
    %v656 = vadd.f32 %v654, %v46
    %v657 = vxor.u32 %v656, 2147483648
    %v658 = vmul.f32 %v657, 1.442695
    %v659 = vpow.pop %v658
    %v660 = vadd.f32 %v659, 1.0
    %v661 = vrcp.pop %v660
    %v662 = vmul.f32 %v660, %v661
    %v663 = vsub.f32 1.0, %v662
    %v664 = vmul.f32 %v661, %v663
    %v665 = vadd.f32 %v661, %v664
    %vm666 = vweird.f32 %v660
    %vm667 = vweird.f32 %v661
    %vm668 = vmor %vm666, %vm667
    %v669 = vsel %vm668, %v661, %v665
    %v670 = vand.u32 2147483647, %v660
    %vm671 = vcmp.eq.f32.partialorder %v670, 8.507059e+37
    %v672 = vand.u32 %v660, 2147483648
    %v673 = vor.u32 1.1754944e-38, %v672
    %v674 = vsel %vm671, %v673, %v669
    %v675 = vmul.f32 1.0, %v674
    %v676 = vtanh.pop %v656
    %v677 = vmul.f32 %v675, %v532
    %679 = vrot.lane.b32.xlu0 %v676, 64
    %v680 = vpop.permute.xlu0 %679
    %v682 = vmul.f32 %v675, %v680
    %684 = vrot.lane.b32.xlu0 %v682, 32
    %v685 = vpop.permute.xlu0 %684
    %v687 = vadd.f32 %v677, %v685
    %v688 = vtanh.pop %v687
    %690 = vrot.lane.b32.xlu0 %v688, 64
    %v691 = vpop.permute.xlu0 %690
    %v693 = vmul.f32 %v675, %v691
    %695 = vrot.lane.b32.xlu0 %v693, 32
    %v696 = vpop.permute.xlu0 %695
    %698 = vst.msk [vmem:[#allocation2 + $0x6] sm:$0x3] %vm232, %v696
    %699 = vmatpush.msra.mxu0 0.0
    %700 = vmatpush.msra.mxu0 0.0
    %701 = vmatpush.msra.mxu0 0.0
    %702 = vmatpush.msra.mxu0 0.0
    %703 = vmatpush.msra.mxu0 0.0
    %704 = vmatpush.msra.mxu0 0.0
    %705 = vmatpush.msra.mxu0 0.0
    %706 = vmatpush.msra.mxu0 0.0
    %707 = vmatpush.msra.mxu0 0.0
    %708 = vmatpush.msra.mxu0 0.0
    %709 = vmatpush.msra.mxu0 0.0
    %710 = vmatpush.msra.mxu0 0.0
    %711 = vmatpush.msra.mxu0 %v37
    %712 = vmatpush.msra.mxu0 %v36
    %713 = vmatpush.msra.mxu0 %v35
    %714 = vmatpush.msra.mxu0 %v34
    %715 = vmatmul.f32.gmra.mxu0 %v634
    %v716 = vpop.f32.mrf.mxu0
    %v717 = vadd.f32 0.0, %v716
    %718 = vdwg.mxu0
    %v719 = vadd.f32 %v82, %v717
    %v720 = vxor.u32 %v719, 2147483648
    %v721 = vmul.f32 %v720, 1.442695
    %v722 = vpow.pop %v721
    %v723 = vadd.f32 %v722, 1.0
    %v724 = vrcp.pop %v723
    %v725 = vmul.f32 %v723, %v724
    %v726 = vsub.f32 1.0, %v725
    %v727 = vmul.f32 %v724, %v726
    %v728 = vadd.f32 %v724, %v727
    %vm729 = vweird.f32 %v723
    %vm730 = vweird.f32 %v724
    %vm731 = vmor %vm729, %vm730
    %v732 = vsel %vm731, %v724, %v728
    %v733 = vand.u32 2147483647, %v723
    %vm734 = vcmp.eq.f32.partialorder %v733, 8.507059e+37
    %v735 = vand.u32 %v723, 2147483648
    %v736 = vor.u32 1.1754944e-38, %v735
    %v737 = vsel %vm734, %v736, %v732
    %v738 = vmul.f32 1.0, %v737
    %v739 = vtanh.pop %v719
    %v741 = vrot.slane %v601, 6
    %v743 = vmul.f32 %v738, %v741
    %745 = vrot.lane.b32.xlu0 %v739, 64
    %v746 = vpop.permute.xlu0 %745
    %v748 = vmul.f32 %v738, %v746
    %750 = vrot.lane.b32.xlu0 %v748, 32
    %v751 = vpop.permute.xlu0 %750
    %v753 = vadd.f32 %v743, %v751
    %v754 = vtanh.pop %v753
    %756 = vrot.lane.b32.xlu0 %v754, 64
    %v757 = vpop.permute.xlu0 %756
    %v759 = vmul.f32 %v738, %v757
    %v760 = vsel %vm54, %v696, 0
    %762 = vmatpush.msra.mxu0 0.0
    %763 = vmatpush.msra.mxu0 0.0
    %764 = vmatpush.msra.mxu0 0.0
    %765 = vmatpush.msra.mxu0 0.0
    %766 = vmatpush.msra.mxu0 0.0
    %767 = vmatpush.msra.mxu0 0.0
    %768 = vmatpush.msra.mxu0 0.0
    %769 = vmatpush.msra.mxu0 0.0
    %770 = vmatpush.msra.mxu0 0.0
    %771 = vmatpush.msra.mxu0 0.0
    %772 = vmatpush.msra.mxu0 0.0
    %773 = vmatpush.msra.mxu0 0.0
    %774 = vmatpush.msra.mxu0 %v42
    %775 = vmatpush.msra.mxu0 %v41
    %776 = vmatpush.msra.mxu0 %v40
    %777 = vmatpush.msra.mxu0 %v39
    %778 = vmatmul.f32.gmra.mxu0 %v760
    %v779 = vpop.f32.mrf.mxu0
    %v780 = vadd.f32 0.0, %v779
    %781 = vdwg.mxu0
    %783 = vrot.lane.b32.xlu0 %v759, 32
    %v784 = vpop.permute.xlu0 %783
    %v785 = vsel %vm54, %v784, 0
    %787 = vmatpush.msra.mxu0 0.0
    %788 = vmatpush.msra.mxu0 0.0
    %789 = vmatpush.msra.mxu0 0.0
    %790 = vmatpush.msra.mxu0 0.0
    %791 = vmatpush.msra.mxu0 0.0
    %792 = vmatpush.msra.mxu0 0.0
    %793 = vmatpush.msra.mxu0 0.0
    %794 = vmatpush.msra.mxu0 0.0
    %795 = vmatpush.msra.mxu0 0.0
    %796 = vmatpush.msra.mxu0 0.0
    %797 = vmatpush.msra.mxu0 0.0
    %798 = vmatpush.msra.mxu0 0.0
    %799 = vmatpush.msra.mxu0 %v32
    %800 = vmatpush.msra.mxu0 %v31
    %801 = vmatpush.msra.mxu0 %v30
    %802 = vmatpush.msra.mxu0 %v29
    %803 = vmatmul.f32.gmra.mxu0 %v785
    %v804 = vpop.f32.mrf.mxu0
    %v805 = vadd.f32 %v780, %v804
    %806 = vdwg.mxu0
    %v807 = vadd.f32 %v805, %v46
    %v808 = vxor.u32 %v807, 2147483648
    %v809 = vmul.f32 %v808, 1.442695
    %v810 = vpow.pop %v809
    %v811 = vadd.f32 %v810, 1.0
    %v812 = vrcp.pop %v811
    %v813 = vmul.f32 %v811, %v812
    %v814 = vsub.f32 1.0, %v813
    %v815 = vmul.f32 %v812, %v814
    %v816 = vadd.f32 %v812, %v815
    %vm817 = vweird.f32 %v811
    %vm818 = vweird.f32 %v812
    %vm819 = vmor %vm817, %vm818
    %v820 = vsel %vm819, %v812, %v816
    %v821 = vand.u32 2147483647, %v811
    %vm822 = vcmp.eq.f32.partialorder %v821, 8.507059e+37
    %v823 = vand.u32 %v811, 2147483648
    %v824 = vor.u32 1.1754944e-38, %v823
    %v825 = vsel %vm822, %v824, %v820
    %v826 = vmul.f32 1.0, %v825
    %v827 = vtanh.pop %v807
    %v828 = vmul.f32 %v826, %v687
    %830 = vrot.lane.b32.xlu0 %v827, 64
    %v831 = vpop.permute.xlu0 %830
    %v833 = vmul.f32 %v826, %v831
    %835 = vrot.lane.b32.xlu0 %v833, 32
    %v836 = vpop.permute.xlu0 %835
    %v838 = vadd.f32 %v828, %v836
    %v839 = vtanh.pop %v838
    %841 = vrot.lane.b32.xlu0 %v839, 64
    %v842 = vpop.permute.xlu0 %841
    %v844 = vmul.f32 %v826, %v842
    %846 = vrot.lane.b32.xlu0 %v844, 32
    %v847 = vpop.permute.xlu0 %846
    %849 = vst.msk [vmem:[#allocation2 + $0x8] sm:$0x3] %vm232, %v847
    %850 = vmatpush.msra.mxu0 0.0
    %851 = vmatpush.msra.mxu0 0.0
    %852 = vmatpush.msra.mxu0 0.0
    %853 = vmatpush.msra.mxu0 0.0
    %854 = vmatpush.msra.mxu0 0.0
    %855 = vmatpush.msra.mxu0 0.0
    %856 = vmatpush.msra.mxu0 0.0
    %857 = vmatpush.msra.mxu0 0.0
    %858 = vmatpush.msra.mxu0 0.0
    %859 = vmatpush.msra.mxu0 0.0
    %860 = vmatpush.msra.mxu0 0.0
    %861 = vmatpush.msra.mxu0 0.0
    %862 = vmatpush.msra.mxu0 %v37
    %863 = vmatpush.msra.mxu0 %v36
    %864 = vmatpush.msra.mxu0 %v35
    %865 = vmatpush.msra.mxu0 %v34
    %866 = vmatmul.f32.gmra.mxu0 %v785
    %v867 = vpop.f32.mrf.mxu0
    %v868 = vadd.f32 0.0, %v867
    %869 = vdwg.mxu0
    %v871 = vrot.slane %v868, 6
    %v873 = vadd.f32 %v82, %v871
    %v874 = vxor.u32 %v873, 2147483648
    %v875 = vmul.f32 %v874, 1.442695
    %v876 = vpow.pop %v875
    %v877 = vadd.f32 %v876, 1.0
    %v878 = vrcp.pop %v877
    %v879 = vmul.f32 %v877, %v878
    %v880 = vsub.f32 1.0, %v879
    %v881 = vmul.f32 %v878, %v880
    %v882 = vadd.f32 %v878, %v881
    %vm883 = vweird.f32 %v877
    %vm884 = vweird.f32 %v878
    %vm885 = vmor %vm883, %vm884
    %v886 = vsel %vm885, %v878, %v882
    %v887 = vand.u32 2147483647, %v877
    %vm888 = vcmp.eq.f32.partialorder %v887, 8.507059e+37
    %v889 = vand.u32 %v877, 2147483648
    %v890 = vor.u32 1.1754944e-38, %v889
    %v891 = vsel %vm888, %v890, %v886
    %v892 = vmul.f32 1.0, %v891
    %v893 = vtanh.pop %v873
    %v895 = vrot.slane %v753, 6
    %v897 = vmul.f32 %v892, %v895
    %899 = vrot.lane.b32.xlu0 %v893, 64
    %v900 = vpop.permute.xlu0 %899
    %v902 = vmul.f32 %v892, %v900
    %904 = vrot.lane.b32.xlu0 %v902, 32
    %v905 = vpop.permute.xlu0 %904
    %v907 = vadd.f32 %v897, %v905
    %v908 = vtanh.pop %v907
    %910 = vrot.lane.b32.xlu0 %v908, 64
    %v911 = vpop.permute.xlu0 %910
    %v913 = vmul.f32 %v892, %v911
    %v914 = vsel %vm54, %v847, 0
    %916 = vmatpush.msra.mxu0 0.0
    %917 = vmatpush.msra.mxu0 0.0
    %918 = vmatpush.msra.mxu0 0.0
    %919 = vmatpush.msra.mxu0 0.0
    %920 = vmatpush.msra.mxu0 0.0
    %921 = vmatpush.msra.mxu0 0.0
    %922 = vmatpush.msra.mxu0 0.0
    %923 = vmatpush.msra.mxu0 0.0
    %924 = vmatpush.msra.mxu0 0.0
    %925 = vmatpush.msra.mxu0 0.0
    %926 = vmatpush.msra.mxu0 0.0
    %927 = vmatpush.msra.mxu0 0.0
    %928 = vmatpush.msra.mxu0 %v42
    %929 = vmatpush.msra.mxu0 %v41
    %930 = vmatpush.msra.mxu0 %v40
    %931 = vmatpush.msra.mxu0 %v39
    %932 = vmatmul.f32.gmra.mxu0 %v914
    %v933 = vpop.f32.mrf.mxu0
    %v934 = vadd.f32 0.0, %v933
    %935 = vdwg.mxu0
    %v937 = vrot.slane %v913, 2
    %938 = vrot.lane.b32.xlu0 %v937, 32
    %v939 = vpop.permute.xlu0 %938
    %v940 = vsel %vm54, %v939, 0
    %942 = vmatpush.msra.mxu0 0.0
    %943 = vmatpush.msra.mxu0 0.0
    %944 = vmatpush.msra.mxu0 0.0
    %945 = vmatpush.msra.mxu0 0.0
    %946 = vmatpush.msra.mxu0 0.0
    %947 = vmatpush.msra.mxu0 0.0
    %948 = vmatpush.msra.mxu0 0.0
    %949 = vmatpush.msra.mxu0 0.0
    %950 = vmatpush.msra.mxu0 0.0
    %951 = vmatpush.msra.mxu0 0.0
    %952 = vmatpush.msra.mxu0 0.0
    %953 = vmatpush.msra.mxu0 0.0
    %954 = vmatpush.msra.mxu0 %v32
    %955 = vmatpush.msra.mxu0 %v31
    %956 = vmatpush.msra.mxu0 %v30
    %957 = vmatpush.msra.mxu0 %v29
    %958 = vmatmul.f32.gmra.mxu0 %v940
    %v959 = vpop.f32.mrf.mxu0
    %v960 = vadd.f32 %v934, %v959
    %961 = vdwg.mxu0
    %v962 = vadd.f32 %v960, %v46
    %v963 = vxor.u32 %v962, 2147483648
    %v964 = vmul.f32 %v963, 1.442695
    %v965 = vpow.pop %v964
    %v966 = vadd.f32 %v965, 1.0
    %v967 = vrcp.pop %v966
    %v968 = vmul.f32 %v966, %v967
    %v969 = vsub.f32 1.0, %v968
    %v970 = vmul.f32 %v967, %v969
    %v971 = vadd.f32 %v967, %v970
    %vm972 = vweird.f32 %v966
    %vm973 = vweird.f32 %v967
    %vm974 = vmor %vm972, %vm973
    %v975 = vsel %vm974, %v967, %v971
    %v976 = vand.u32 2147483647, %v966
    %vm977 = vcmp.eq.f32.partialorder %v976, 8.507059e+37
    %v978 = vand.u32 %v966, 2147483648
    %v979 = vor.u32 1.1754944e-38, %v978
    %v980 = vsel %vm977, %v979, %v975
    %v981 = vmul.f32 1.0, %v980
    %v982 = vtanh.pop %v962
    %v983 = vmul.f32 %v981, %v838
    %985 = vrot.lane.b32.xlu0 %v982, 64
    %v986 = vpop.permute.xlu0 %985
    %v988 = vmul.f32 %v981, %v986
    %990 = vrot.lane.b32.xlu0 %v988, 32
    %v991 = vpop.permute.xlu0 %990
    %v993 = vadd.f32 %v983, %v991
    %v994 = vtanh.pop %v993
    %996 = vrot.lane.b32.xlu0 %v994, 64
    %v997 = vpop.permute.xlu0 %996
    %v999 = vmul.f32 %v981, %v997
    %1001 = vrot.lane.b32.xlu0 %v999, 32
    %v1002 = vpop.permute.xlu0 %1001
    %1004 = vst.msk [vmem:[#allocation2 + $0xa] sm:$0x3] %vm232, %v1002
    %1005 = vmatpush.msra.mxu0 0.0
    %1006 = vmatpush.msra.mxu0 0.0
    %1007 = vmatpush.msra.mxu0 0.0
    %1008 = vmatpush.msra.mxu0 0.0
    %1009 = vmatpush.msra.mxu0 0.0
    %1010 = vmatpush.msra.mxu0 0.0
    %1011 = vmatpush.msra.mxu0 0.0
    %1012 = vmatpush.msra.mxu0 0.0
    %1013 = vmatpush.msra.mxu0 0.0
    %1014 = vmatpush.msra.mxu0 0.0
    %1015 = vmatpush.msra.mxu0 0.0
    %1016 = vmatpush.msra.mxu0 0.0
    %1017 = vmatpush.msra.mxu0 %v37
    %1018 = vmatpush.msra.mxu0 %v36
    %1019 = vmatpush.msra.mxu0 %v35
    %1020 = vmatpush.msra.mxu0 %v34
    %1021 = vmatmul.f32.gmra.mxu0 %v940
    %v1022 = vpop.f32.mrf.mxu0
    %v1023 = vadd.f32 0.0, %v1022
    %1024 = vdwg.mxu0
    %v1026 = vrot.slane %v1023, 4
    %v1028 = vadd.f32 %v82, %v1026
    %v1029 = vxor.u32 %v1028, 2147483648
    %v1030 = vmul.f32 %v1029, 1.442695
    %v1031 = vpow.pop %v1030
    %v1032 = vadd.f32 %v1031, 1.0
    %v1033 = vrcp.pop %v1032
    %v1034 = vmul.f32 %v1032, %v1033
    %v1035 = vsub.f32 1.0, %v1034
    %v1036 = vmul.f32 %v1033, %v1035
    %v1037 = vadd.f32 %v1033, %v1036
    %vm1038 = vweird.f32 %v1032
    %vm1039 = vweird.f32 %v1033
    %vm1040 = vmor %vm1038, %vm1039
    %v1041 = vsel %vm1040, %v1033, %v1037
    %v1042 = vand.u32 2147483647, %v1032
    %vm1043 = vcmp.eq.f32.partialorder %v1042, 8.507059e+37
    %v1044 = vand.u32 %v1032, 2147483648
    %v1045 = vor.u32 1.1754944e-38, %v1044
    %v1046 = vsel %vm1043, %v1045, %v1041
    %v1047 = vmul.f32 1.0, %v1046
    %v1048 = vtanh.pop %v1028
    %v1050 = vrot.slane %v907, 6
    %v1052 = vmul.f32 %v1047, %v1050
    %1054 = vrot.lane.b32.xlu0 %v1048, 64
    %v1055 = vpop.permute.xlu0 %1054
    %v1057 = vmul.f32 %v1047, %v1055
    %1059 = vrot.lane.b32.xlu0 %v1057, 32
    %v1060 = vpop.permute.xlu0 %1059
    %v1062 = vadd.f32 %v1052, %v1060
    %v1063 = vtanh.pop %v1062
    %1065 = vrot.lane.b32.xlu0 %v1063, 64
    %v1066 = vpop.permute.xlu0 %1065
    %v1068 = vmul.f32 %v1047, %v1066
    %v1069 = vsel %vm54, %v1002, 0
    %1071 = vmatpush.msra.mxu0 0.0
    %1072 = vmatpush.msra.mxu0 0.0
    %1073 = vmatpush.msra.mxu0 0.0
    %1074 = vmatpush.msra.mxu0 0.0
    %1075 = vmatpush.msra.mxu0 0.0
    %1076 = vmatpush.msra.mxu0 0.0
    %1077 = vmatpush.msra.mxu0 0.0
    %1078 = vmatpush.msra.mxu0 0.0
    %1079 = vmatpush.msra.mxu0 0.0
    %1080 = vmatpush.msra.mxu0 0.0
    %1081 = vmatpush.msra.mxu0 0.0
    %1082 = vmatpush.msra.mxu0 0.0
    %1083 = vmatpush.msra.mxu0 %v42
    %1084 = vmatpush.msra.mxu0 %v41
    %1085 = vmatpush.msra.mxu0 %v40
    %1086 = vmatpush.msra.mxu0 %v39
    %1087 = vmatmul.f32.gmra.mxu0 %v1069
    %v1088 = vpop.f32.mrf.mxu0
    %v1089 = vadd.f32 0.0, %v1088
    %1090 = vdwg.mxu0
    %v1092 = vrot.slane %v1068, 4
    %1093 = vrot.lane.b32.xlu0 %v1092, 32
    %v1094 = vpop.permute.xlu0 %1093
    %v1095 = vsel %vm54, %v1094, 0
    %1097 = vmatpush.msra.mxu0 0.0
    %1098 = vmatpush.msra.mxu0 0.0
    %1099 = vmatpush.msra.mxu0 0.0
    %1100 = vmatpush.msra.mxu0 0.0
    %1101 = vmatpush.msra.mxu0 0.0
    %1102 = vmatpush.msra.mxu0 0.0
    %1103 = vmatpush.msra.mxu0 0.0
    %1104 = vmatpush.msra.mxu0 0.0
    %1105 = vmatpush.msra.mxu0 0.0
    %1106 = vmatpush.msra.mxu0 0.0
    %1107 = vmatpush.msra.mxu0 0.0
    %1108 = vmatpush.msra.mxu0 0.0
    %1109 = vmatpush.msra.mxu0 %v32
    %1110 = vmatpush.msra.mxu0 %v31
    %1111 = vmatpush.msra.mxu0 %v30
    %1112 = vmatpush.msra.mxu0 %v29
    %1113 = vmatmul.f32.gmra.mxu0 %v1095
    %v1114 = vpop.f32.mrf.mxu0
    %v1115 = vadd.f32 %v1089, %v1114
    %1116 = vdwg.mxu0
    %v1117 = vadd.f32 %v1115, %v46
    %v1118 = vxor.u32 %v1117, 2147483648
    %v1119 = vmul.f32 %v1118, 1.442695
    %v1120 = vpow.pop %v1119
    %v1121 = vadd.f32 %v1120, 1.0
    %v1122 = vrcp.pop %v1121
    %v1123 = vmul.f32 %v1121, %v1122
    %v1124 = vsub.f32 1.0, %v1123
    %v1125 = vmul.f32 %v1122, %v1124
    %v1126 = vadd.f32 %v1122, %v1125
    %vm1127 = vweird.f32 %v1121
    %vm1128 = vweird.f32 %v1122
    %vm1129 = vmor %vm1127, %vm1128
    %v1130 = vsel %vm1129, %v1122, %v1126
    %v1131 = vand.u32 2147483647, %v1121
    %vm1132 = vcmp.eq.f32.partialorder %v1131, 8.507059e+37
    %v1133 = vand.u32 %v1121, 2147483648
    %v1134 = vor.u32 1.1754944e-38, %v1133
    %v1135 = vsel %vm1132, %v1134, %v1130
    %v1136 = vmul.f32 1.0, %v1135
    %v1137 = vtanh.pop %v1117
    %v1138 = vmul.f32 %v1136, %v993
    %1140 = vrot.lane.b32.xlu0 %v1137, 64
    %v1141 = vpop.permute.xlu0 %1140
    %v1143 = vmul.f32 %v1136, %v1141
    %1145 = vrot.lane.b32.xlu0 %v1143, 32
    %v1146 = vpop.permute.xlu0 %1145
    %v1148 = vadd.f32 %v1138, %v1146
    %v1149 = vtanh.pop %v1148
    %1151 = vrot.lane.b32.xlu0 %v1149, 64
    %v1152 = vpop.permute.xlu0 %1151
    %v1154 = vmul.f32 %v1136, %v1152
    %1156 = vrot.lane.b32.xlu0 %v1154, 32
    %v1157 = vpop.permute.xlu0 %1156
    %1159 = vst.msk [vmem:[#allocation2 + $0xc] sm:$0x3] %vm232, %v1157
    %1160 = vmatpush.msra.mxu0 0.0
    %1161 = vmatpush.msra.mxu0 0.0
    %1162 = vmatpush.msra.mxu0 0.0
    %1163 = vmatpush.msra.mxu0 0.0
    %1164 = vmatpush.msra.mxu0 0.0
    %1165 = vmatpush.msra.mxu0 0.0
    %1166 = vmatpush.msra.mxu0 0.0
    %1167 = vmatpush.msra.mxu0 0.0
    %1168 = vmatpush.msra.mxu0 0.0
    %1169 = vmatpush.msra.mxu0 0.0
    %1170 = vmatpush.msra.mxu0 0.0
    %1171 = vmatpush.msra.mxu0 0.0
    %1172 = vmatpush.msra.mxu0 %v37
    %1173 = vmatpush.msra.mxu0 %v36
    %1174 = vmatpush.msra.mxu0 %v35
    %1175 = vmatpush.msra.mxu0 %v34
    %1176 = vmatmul.f32.gmra.mxu0 %v1095
    %v1177 = vpop.f32.mrf.mxu0
    %v1178 = vadd.f32 0.0, %v1177
    %1179 = vdwg.mxu0
    %v1181 = vrot.slane %v1178, 2
    %v1183 = vadd.f32 %v82, %v1181
    %v1184 = vxor.u32 %v1183, 2147483648
    %v1185 = vmul.f32 %v1184, 1.442695
    %v1186 = vpow.pop %v1185
    %v1187 = vadd.f32 %v1186, 1.0
    %v1188 = vrcp.pop %v1187
    %v1189 = vmul.f32 %v1187, %v1188
    %v1190 = vsub.f32 1.0, %v1189
    %v1191 = vmul.f32 %v1188, %v1190
    %v1192 = vadd.f32 %v1188, %v1191
    %vm1193 = vweird.f32 %v1187
    %vm1194 = vweird.f32 %v1188
    %vm1195 = vmor %vm1193, %vm1194
    %v1196 = vsel %vm1195, %v1188, %v1192
    %v1197 = vand.u32 2147483647, %v1187
    %vm1198 = vcmp.eq.f32.partialorder %v1197, 8.507059e+37
    %v1199 = vand.u32 %v1187, 2147483648
    %v1200 = vor.u32 1.1754944e-38, %v1199
    %v1201 = vsel %vm1198, %v1200, %v1196
    %v1202 = vmul.f32 1.0, %v1201
    %v1203 = vtanh.pop %v1183
    %v1205 = vrot.slane %v1062, 6
    %v1207 = vmul.f32 %v1202, %v1205
    %1209 = vrot.lane.b32.xlu0 %v1203, 64
    %v1210 = vpop.permute.xlu0 %1209
    %v1212 = vmul.f32 %v1202, %v1210
    %1214 = vrot.lane.b32.xlu0 %v1212, 32
    %v1215 = vpop.permute.xlu0 %1214
    %v1217 = vadd.f32 %v1207, %v1215
    %v1218 = vtanh.pop %v1217
    %1220 = vrot.lane.b32.xlu0 %v1218, 64
    %v1221 = vpop.permute.xlu0 %1220
    %v1223 = vmul.f32 %v1202, %v1221
    %v1224 = vsel %vm54, %v1157, 0
    %1226 = vmatpush.msra.mxu0 0.0
    %1227 = vmatpush.msra.mxu0 0.0
    %1228 = vmatpush.msra.mxu0 0.0
    %1229 = vmatpush.msra.mxu0 0.0
    %1230 = vmatpush.msra.mxu0 0.0
    %1231 = vmatpush.msra.mxu0 0.0
    %1232 = vmatpush.msra.mxu0 0.0
    %1233 = vmatpush.msra.mxu0 0.0
    %1234 = vmatpush.msra.mxu0 0.0
    %1235 = vmatpush.msra.mxu0 0.0
    %1236 = vmatpush.msra.mxu0 0.0
    %1237 = vmatpush.msra.mxu0 0.0
    %1238 = vmatpush.msra.mxu0 %v42
    %1239 = vmatpush.msra.mxu0 %v41
    %1240 = vmatpush.msra.mxu0 %v40
    %1241 = vmatpush.msra.mxu0 %v39
    %1242 = vmatmul.f32.gmra.mxu0 %v1224
    %v1243 = vpop.f32.mrf.mxu0
    %v1244 = vadd.f32 0.0, %v1243
    %1245 = vdwg.mxu0
    %v1247 = vrot.slane %v1223, 6
    %1248 = vrot.lane.b32.xlu0 %v1247, 32
    %v1249 = vpop.permute.xlu0 %1248
    %v1250 = vsel %vm54, %v1249, 0
    %1252 = vmatpush.msra.mxu0 0.0
    %1253 = vmatpush.msra.mxu0 0.0
    %1254 = vmatpush.msra.mxu0 0.0
    %1255 = vmatpush.msra.mxu0 0.0
    %1256 = vmatpush.msra.mxu0 0.0
    %1257 = vmatpush.msra.mxu0 0.0
    %1258 = vmatpush.msra.mxu0 0.0
    %1259 = vmatpush.msra.mxu0 0.0
    %1260 = vmatpush.msra.mxu0 0.0
    %1261 = vmatpush.msra.mxu0 0.0
    %1262 = vmatpush.msra.mxu0 0.0
    %1263 = vmatpush.msra.mxu0 0.0
    %1264 = vmatpush.msra.mxu0 %v32
    %1265 = vmatpush.msra.mxu0 %v31
    %1266 = vmatpush.msra.mxu0 %v30
    %1267 = vmatpush.msra.mxu0 %v29
    %1268 = vmatmul.f32.gmra.mxu0 %v1250
    %v1269 = vpop.f32.mrf.mxu0
    %v1270 = vadd.f32 %v1244, %v1269
    %1271 = vdwg.mxu0
    %v1272 = vadd.f32 %v1270, %v46
    %v1273 = vxor.u32 %v1272, 2147483648
    %v1274 = vmul.f32 %v1273, 1.442695
    %v1275 = vpow.pop %v1274
    %v1276 = vadd.f32 %v1275, 1.0
    %v1277 = vrcp.pop %v1276
    %v1278 = vmul.f32 %v1276, %v1277
    %v1279 = vsub.f32 1.0, %v1278
    %v1280 = vmul.f32 %v1277, %v1279
    %v1281 = vadd.f32 %v1277, %v1280
    %vm1282 = vweird.f32 %v1276
    %vm1283 = vweird.f32 %v1277
    %vm1284 = vmor %vm1282, %vm1283
    %v1285 = vsel %vm1284, %v1277, %v1281
    %v1286 = vand.u32 2147483647, %v1276
    %vm1287 = vcmp.eq.f32.partialorder %v1286, 8.507059e+37
    %v1288 = vand.u32 %v1276, 2147483648
    %v1289 = vor.u32 1.1754944e-38, %v1288
    %v1290 = vsel %vm1287, %v1289, %v1285
    %v1291 = vmul.f32 1.0, %v1290
    %v1292 = vtanh.pop %v1272
    %v1293 = vmul.f32 %v1291, %v1148
    %1295 = vrot.lane.b32.xlu0 %v1292, 64
    %v1296 = vpop.permute.xlu0 %1295
    %v1298 = vmul.f32 %v1291, %v1296
    %1300 = vrot.lane.b32.xlu0 %v1298, 32
    %v1301 = vpop.permute.xlu0 %1300
    %v1303 = vadd.f32 %v1293, %v1301
    %v1304 = vtanh.pop %v1303
    %1306 = vrot.lane.b32.xlu0 %v1304, 64
    %v1307 = vpop.permute.xlu0 %1306
    %v1309 = vmul.f32 %v1291, %v1307
    %1311 = vrot.lane.b32.xlu0 %v1309, 32
    %v1312 = vpop.permute.xlu0 %1311
    %1314 = vst.msk [vmem:[#allocation2 + $0xe] sm:$0x3] %vm232, %v1312
    %v1315 = vld [vmem:[#allocation2] sm:$0xff]
    %v1316 = vld [vmem:[#allocation2 + $0x8] sm:$0xff]
    %v1317 = vld [vmem:[%s3] sm:$0xff]
    %v1318 = vld [vmem:[%s3 + $0x8] sm:$0xff]
    %v1319 = vld [vmem:[%s3 + $0x10] sm:$0xff]
    %v1320 = vld [vmem:[%s3 + $0x18] sm:$0xff]
    %v1321 = vld [vmem:[%s4] sm:$0x1]
    %v1323 = vperm.slane %v1321, 0
    %v1326 = vsel %vm54, %v1315, 0
    %v1329 = vsel %vm54, %v1316, 0
    %1331 = vmatpush.msra.mxu0 0.0
    %1332 = vmatpush.msra.mxu0 0.0
    %1333 = vmatpush.msra.mxu0 0.0
    %1334 = vmatpush.msra.mxu0 0.0
    %1335 = vmatpush.msra.mxu0 0.0
    %1336 = vmatpush.msra.mxu0 0.0
    %1337 = vmatpush.msra.mxu0 0.0
    %1338 = vmatpush.msra.mxu0 0.0
    %1339 = vmatpush.msra.mxu0 0.0
    %1340 = vmatpush.msra.mxu0 0.0
    %1341 = vmatpush.msra.mxu0 0.0
    %1342 = vmatpush.msra.mxu0 0.0
    %1343 = vmatpush.msra.mxu0 %v1320
    %1344 = vmatpush.msra.mxu0 %v1319
    %1345 = vmatpush.msra.mxu0 %v1318
    %1346 = vmatpush.msra.mxu0 %v1317
    %1347 = vmatmul.f32.gmra.mxu0 %v1326
    %v1348 = vpop.f32.mrf.mxu0
    %v1349 = vadd.f32 %v1323, %v1348
    %1350 = vmatmul.f32.gmra.mxu0 %v1329
    %v1351 = vpop.f32.mrf.mxu0
    %v1352 = vadd.f32 %v1323, %v1351
    %1353 = vdwg.mxu0
    %1354 = vmax.xlane.f32.xlu0 %v1349
    %v1355 = vpop.xlane.xlu0 %1354
    %1356 = vmax.xlane.f32.xlu0 %v1352
    %v1357 = vpop.xlane.xlu0 %1356
    %v1358 = vsub.f32 %v1349, %v1355
    %v1359 = vsub.f32 %v1352, %v1357
    %v1360 = vmul.f32 %v1358, 1.442695
    %v1361 = vpow.pop %v1360
    %v1362 = vmul.f32 %v1359, 1.442695
    %v1363 = vpow.pop %v1362
    %1364 = vadd.xlane.f32.xlu0 %v1361
    %v1365 = vpop.xlane.xlu0 %1364
    %1366 = vadd.xlane.f32.xlu0 %v1363
    %v1367 = vpop.xlane.xlu0 %1366
    %v1368 = vlog2.pop %v1365
    %v1369 = vmul.f32 %v1368, 0.6931472
    %v1370 = vlog2.pop %v1367
    %v1371 = vmul.f32 %v1370, 0.6931472
    %v1372 = vsub.f32 %v1358, %v1369
    %v1373 = vsub.f32 %v1359, %v1371
    %1374 = vst [vmem:[#allocation3] sm:$0xff] %v1372
    %1375 = vst [vmem:[#allocation3 + $0x8] sm:$0xff] %v1373
    %v1376 = vmul.f32 %v1372, 1.442695
    %v1377 = vpow.pop %v1376
    %v1378 = vmul.f32 %v1373, 1.442695
    %v1379 = vpow.pop %v1378
    %1380 = vst [vmem:[#allocation5] sm:$0xff] %v1377
    %1381 = vst [vmem:[#allocation5 + $0x8] sm:$0xff] %v1379
    // Predicated region
    $region22: #{decoder_forward.1} parent=1 // pred_check
      _
    $region23: #{decoder_forward.1} parent=1 // pred_check_branch
      %1383 = sbr.rel (0) target = $region25
    $region24: #{decoder_forward.1} parent=1 // pred_region
      %1385 = vsyncadd [#allocation4], 0
      %s1386 = sshll.u32 [#allocation3], 4
      %s1387 = int_to_ptr.vmem [resolvable:$true] %s1386
      %s1388 = sshll.u32 %s5, 4
      %s1389 = int_to_ptr.hbm [resolvable:$true] %s1388
      %1394 = dma.vmem_to_hbm [thread:$0]  %s1387, 256, %s1389, [#allocation4], 128, 128, 8
    $region25: #{decoder_forward.1} parent=1 // pred_fallthru
      _
    // Predicated region
    $region26: #{decoder_forward.1} parent=1 // pred_check
      _
    $region27: #{decoder_forward.1} parent=1 // pred_check_branch
      %1396 = sbr.rel (0) target = $region29
    $region28: #{decoder_forward.1} parent=1 // pred_region
      %1398 = vsyncadd [#allocation6], 0
      %s1399 = sshll.u32 [#allocation5], 4
      %s1400 = int_to_ptr.vmem [resolvable:$true] %s1399
      %s1401 = sshll.u32 %s6, 4
      %s1402 = int_to_ptr.hbm [resolvable:$true] %s1401
      %1407 = dma.vmem_to_hbm [thread:$0]  %s1400, 256, %s1402, [#allocation6], 128, 128, 8
    $region29: #{decoder_forward.1} parent=1 // pred_fallthru
      _
    // Predicated region
    $region30: #{decoder_forward.1} parent=1 // pred_check
      _
    $region31: #{decoder_forward.1} parent=1 // pred_check_branch
      %1409 = sbr.rel (0) target = $region33
    $region32: #{decoder_forward.1} parent=1 // pred_region
      %1411 = dma.done [#allocation4], 256
    $region33: #{decoder_forward.1} parent=1 // pred_fallthru
      _
    // Predicated region
    $region34: #{decoder_forward.1} parent=1 // pred_check
      _
    $region35: #{decoder_forward.1} parent=1 // pred_check_branch
      %1413 = sbr.rel (0) target = $region37
    $region36: #{decoder_forward.1} parent=1 // pred_region
      %1415 = dma.done [#allocation6], 256
    $region37: #{decoder_forward.1} parent=1 // pred_fallthru
      _
    %1416 = vsyncpa [#allocation4], 1
    %1417 = vsyncpa [#allocation6], 1

</llo_original>
